<compile_context>
chip_gen: v6e
topology: v6e:2x2x1
jax: 0.10.0
libtpu: 0.0.40
codegen_flags: <defaults>
</compile_context>

<pallas_src>
import functools
import math

import jax
import jax.numpy as jnp
from jax.experimental import pallas as pl
from jax.experimental.pallas import tpu as pltpu


def _mha_kernel(q_ref, k_ref, v_ref, wq_ref, wk_ref, wv_ref, wfc_ref,
                out_ref, *attn_refs, n_heads, d_k, d_v, eps, matmul_dtype):
    """One (batch, query-tile) step: fused projections + per-head attention
    + fused output projection + residual add + LayerNorm."""
    exact = jnp.dtype(matmul_dtype) == jnp.dtype(jnp.float32)

    residual = q_ref[0].astype(jnp.float32)            # [TQ, d_model] (residual path, f32)
    x_q = residual.astype(matmul_dtype)
    x_k = k_ref[0]                                     # [Lk, d_model], already matmul_dtype
    x_v = v_ref[0]

    # Fused, lane-dense projections: contract over d_model (deep MXU K dim).
    # The 1/sqrt(d_k) softmax scale is already folded into wq (wrapper).
    q_all = jnp.dot(x_q, wq_ref[...], preferred_element_type=jnp.float32)   # [TQ, H*d_k]
    k_all = jnp.dot(x_k, wk_ref[...], preferred_element_type=jnp.float32)   # [Lk, H*d_k]
    v_all = jnp.dot(x_v, wv_ref[...], preferred_element_type=jnp.float32)   # [Lk, H*d_v]

    # Per-head attention: static unroll, each step is a plain 2-D MXU matmul.
    ctx_parts = []
    for h in range(n_heads):
        qh = q_all[:, h * d_k:(h + 1) * d_k].astype(matmul_dtype)   # [TQ, d_k]
        kh = k_all[:, h * d_k:(h + 1) * d_k].astype(matmul_dtype)   # [Lk, d_k]
        vh = v_all[:, h * d_v:(h + 1) * d_v].astype(matmul_dtype)   # [Lk, d_v]

        scores = jnp.einsum('qd,kd->qk', qh, kh,
                            preferred_element_type=jnp.float32)     # [TQ, Lk]
        s_max = jnp.max(scores, axis=-1, keepdims=True)
        e = jnp.exp(scores - s_max)
        denom = jnp.sum(e, axis=-1, keepdims=True)
        if exact:
            attn_h = e / denom                                       # exact-parity path
        else:
            attn_h = e * pl.reciprocal(denom, approx=True)           # EUP slot, ~free

        if attn_refs:                                                # optional attn output
            attn_refs[0][0, h] = attn_h.astype(attn_refs[0].dtype)

        ctx_parts.append(jnp.dot(attn_h.astype(matmul_dtype), vh,
                                 preferred_element_type=jnp.float32))  # [TQ, d_v]

    # Repack heads onto lanes, then ONE deep output projection over H*d_v.
    ctx = jnp.concatenate(ctx_parts, axis=-1)                         # [TQ, H*d_v]
    out = jnp.dot(ctx.astype(matmul_dtype), wfc_ref[...],
                  preferred_element_type=jnp.float32)                 # [TQ, d_model]

    # Residual add + LayerNorm (gamma=1, beta=0, biased variance), in f32.
    y = out + residual
    mean = jnp.mean(y, axis=-1, keepdims=True)
    var = jnp.mean(jnp.square(y - mean), axis=-1, keepdims=True)
    out_ref[0] = ((y - mean) * jax.lax.rsqrt(var + eps)).astype(out_ref.dtype)


def _pick_q_tile(len_q, cap):
    """Largest multiple-of-8 tile <= cap that divides len_q (or full len_q)."""
    if len_q <= cap:
        return len_q
    for t in range(cap, 7, -8):
        if len_q % t == 0:
            return t
    return len_q   # awkward length: single full-length tile (valid per (8,128) rule)


def multi_head_attention(input_Q, input_K, input_V,
                         W_Q, W_K, W_V, W_fc,
                         *, n_heads, d_k, d_v, eps=1e-5,
                         matmul_dtype=jnp.bfloat16,
                         out_dtype=jnp.float32,
                         attn_dtype=None,
                         return_attn=True,
                         q_tile=None,
                         vmem_limit_bytes=None):
    """input_*: [B, len, d_model]; W_* in PyTorch nn.Linear layout [out, in]."""
    B, len_q, d_model = input_Q.shape
    len_k = input_K.shape[1]
    assert input_V.shape[1] == len_k

    if attn_dtype is None:
        attn_dtype = (jnp.float32
                      if jnp.dtype(matmul_dtype) == jnp.dtype(jnp.float32)
                      else jnp.bfloat16)

    # Weights: [out, in] -> [in, out]; fold softmax scale into W_Q; everything
    # the MXU touches ships in matmul_dtype.
    scale = 1.0 / math.sqrt(d_k)
    wq = (W_Q.T * scale).astype(matmul_dtype)          # [d_model, H*d_k]
    wk = W_K.T.astype(matmul_dtype)                    # [d_model, H*d_k]
    wv = W_V.T.astype(matmul_dtype)                    # [d_model, H*d_v]
    wfc = W_fc.T.astype(matmul_dtype)                  # [H*d_v, d_model]

    # K / V streams in matmul_dtype (halves the dominant HBM->VMEM DMA);
    # Q stays f32 because it also feeds the residual / LayerNorm path.
    q_in = input_Q.astype(jnp.float32)
    k_in = input_K.astype(matmul_dtype)
    v_in = input_V.astype(matmul_dtype)

    if q_tile is None:
        q_tile = _pick_q_tile(len_q, cap=256 if return_attn else 512)
    assert len_q % q_tile == 0, (len_q, q_tile)
    n_q_tiles = len_q // q_tile

    in_specs = [
        pl.BlockSpec((1, q_tile, d_model), lambda b, qt: (b, qt, 0)),   # Q (query-tiled, f32)
        pl.BlockSpec((1, len_k, d_model), lambda b, qt: (b, 0, 0)),     # K (per-batch resident)
        pl.BlockSpec((1, len_k, d_model), lambda b, qt: (b, 0, 0)),     # V (per-batch resident)
        pl.BlockSpec(wq.shape, lambda b, qt: (0, 0)),
        pl.BlockSpec(wk.shape, lambda b, qt: (0, 0)),
        pl.BlockSpec(wv.shape, lambda b, qt: (0, 0)),
        pl.BlockSpec(wfc.shape, lambda b, qt: (0, 0)),
    ]

    out_shapes = [jax.ShapeDtypeStruct((B, len_q, d_model), out_dtype)]
    out_specs = [pl.BlockSpec((1, q_tile, d_model), lambda b, qt: (b, qt, 0))]
    if return_attn:
        out_shapes.append(jax.ShapeDtypeStruct((B, n_heads, len_q, len_k), attn_dtype))
        out_specs.append(
            pl.BlockSpec((1, n_heads, q_tile, len_k), lambda b, qt: (b, 0, qt, 0)))

    itm = jnp.dtype(matmul_dtype).itemsize
    if vmem_limit_bytes is None:
        block_bytes = (
            q_tile * d_model * 4                                        # Q block (f32)
            + 2 * len_k * d_model * itm                                 # K + V blocks
            + (2 * d_model * n_heads * d_k
               + d_model * n_heads * d_v
               + n_heads * d_v * d_model) * itm                         # weights
            + q_tile * d_model * jnp.dtype(out_dtype).itemsize          # output block
            + (n_heads * q_tile * len_k * jnp.dtype(attn_dtype).itemsize
               if return_attn else 0))
        # double-buffered blocks + temporaries headroom; floor 32 MiB, cap
        # 64 MiB (v7x-safe). Override for bigger tiles on v5e/v6e.
        vmem_limit_bytes = min(max(4 * block_bytes + (8 << 20), 32 << 20), 64 << 20)

    flops = 2 * B * (
        len_q * d_model * n_heads * d_k          # Q projection
        + len_k * d_model * n_heads * d_k        # K projection
        + len_k * d_model * n_heads * d_v        # V projection
        + n_heads * len_q * len_k * d_k          # QK^T
        + n_heads * len_q * len_k * d_v          # attn @ V
        + len_q * n_heads * d_v * d_model)       # output projection
    transcendentals = B * n_heads * len_q * len_k
    bytes_accessed = (
        4 * B * len_q * d_model                                          # Q (f32)
        + 2 * itm * B * len_k * d_model                                  # K + V
        + itm * (wq.size + wk.size + wv.size + wfc.size)                 # weights
        + jnp.dtype(out_dtype).itemsize * B * len_q * d_model            # output
        + (jnp.dtype(attn_dtype).itemsize * B * n_heads * len_q * len_k
           if return_attn else 0))

    kernel = functools.partial(
        _mha_kernel, n_heads=n_heads, d_k=d_k, d_v=d_v, eps=eps,
        matmul_dtype=matmul_dtype)

    results = pl.pallas_call(
        kernel,
        out_shape=tuple(out_shapes),
        grid_spec=pltpu.PrefetchScalarGridSpec(
            num_scalar_prefetch=0,
            grid=(B, n_q_tiles),
            in_specs=in_specs,
            out_specs=tuple(out_specs)),
        compiler_params=pltpu.CompilerParams(
            dimension_semantics=("parallel", "parallel"),
            vmem_limit_bytes=int(vmem_limit_bytes)),
        cost_estimate=pl.CostEstimate(
            flops=int(flops),
            transcendentals=int(transcendentals),
            bytes_accessed=int(bytes_accessed)),
    )(q_in, k_in, v_in, wq, wk, wv, wfc)

    if return_attn:
        return results[0], results[1]
    return results[0]


def _reference(input_Q, input_K, input_V, W_Q, W_K, W_V, W_fc,
               *, n_heads, d_k, d_v, eps=1e-5):
    """Pure-JAX port of the PyTorch module (full-precision matmuls)."""
    HI = jax.lax.Precision.HIGHEST
    B = input_Q.shape[0]
    Q = jnp.matmul(input_Q, W_Q.T, precision=HI).reshape(B, -1, n_heads, d_k).transpose(0, 2, 1, 3)
    K = jnp.matmul(input_K, W_K.T, precision=HI).reshape(B, -1, n_heads, d_k).transpose(0, 2, 1, 3)
    V = jnp.matmul(input_V, W_V.T, precision=HI).reshape(B, -1, n_heads, d_v).transpose(0, 2, 1, 3)
    scores = jnp.einsum('bhqd,bhkd->bhqk', Q, K, precision=HI) / math.sqrt(d_k)
    attn = jax.nn.softmax(scores, axis=-1)
    context = jnp.einsum('bhqk,bhkd->bhqd', attn, V, precision=HI)
    context = context.transpose(0, 2, 1, 3).reshape(B, -1, n_heads * d_v)
    out = jnp.matmul(context, W_fc.T, precision=HI) + input_Q
    mean = out.mean(-1, keepdims=True)
    var = ((out - mean) ** 2).mean(-1, keepdims=True)
    return (out - mean) / jnp.sqrt(var + eps), attn


if __name__ == "__main__":
    # Small, lane-dense deterministic config (H * d_k = d_model = 128).
    B, d_model, d_k, d_v, n_heads = 2, 128, 32, 32, 4
    len_q, len_k = 16, 16

    key = jax.random.PRNGKey(0)
    ks = jax.random.split(key, 7)
    input_Q = jax.random.normal(ks[0], (B, len_q, d_model), jnp.float32)
    input_K = jax.random.normal(ks[1], (B, len_k, d_model), jnp.float32)
    input_V = jax.random.normal(ks[2], (B, len_k, d_model), jnp.float32)

    # nn.Linear weights, PyTorch layout [out_features, in_features], bias=False.
    W_Q = jax.random.normal(ks[3], (n_heads * d_k, d_model), jnp.float32) * 0.1
    W_K = jax.random.normal(ks[4], (n_heads * d_k, d_model), jnp.float32) * 0.1
    W_V = jax.random.normal(ks[5], (n_heads * d_v, d_model), jnp.float32) * 0.1
    W_fc = jax.random.normal(ks[6], (d_model, n_heads * d_v), jnp.float32) * 0.1

    ref_out, ref_attn = _reference(
        input_Q, input_K, input_V, W_Q, W_K, W_V, W_fc,
        n_heads=n_heads, d_k=d_k, d_v=d_v)

    # 1) Exact path (f32 MXU operands, exact softmax divide): tight parity.
    out32, attn32 = multi_head_attention(
        input_Q, input_K, input_V, W_Q, W_K, W_V, W_fc,
        n_heads=n_heads, d_k=d_k, d_v=d_v, matmul_dtype=jnp.float32)
    jax.block_until_ready((out32, attn32))
    assert jnp.allclose(out32, ref_out, atol=1e-3, rtol=1e-3), \
        float(jnp.max(jnp.abs(out32 - ref_out)))
    assert jnp.allclose(attn32, ref_attn, atol=1e-3, rtol=1e-3), \
        float(jnp.max(jnp.abs(attn32 - ref_attn)))

    # 2) Fast path (bf16 streams / MXU operands, f32 accumulation, approx
    #    reciprocal, bf16 attn storage): loose parity.
    out16, attn16 = multi_head_attention(
        input_Q, input_K, input_V, W_Q, W_K, W_V, W_fc,
        n_heads=n_heads, d_k=d_k, d_v=d_v, matmul_dtype=jnp.bfloat16)
    jax.block_until_ready((out16, attn16))
    assert jnp.allclose(out16, ref_out, atol=1e-1, rtol=1e-1), \
        float(jnp.max(jnp.abs(out16 - ref_out)))
    assert jnp.allclose(attn16.astype(jnp.float32), ref_attn, atol=1e-1, rtol=1e-1)

    # 3) Attention probabilities dropped (removes the dominant HBM write).
    out_only = multi_head_attention(
        input_Q, input_K, input_V, W_Q, W_K, W_V, W_fc,
        n_heads=n_heads, d_k=d_k, d_v=d_v, matmul_dtype=jnp.bfloat16,
        return_attn=False)
    jax.block_until_ready(out_only)
    assert jnp.allclose(out_only, ref_out, atol=1e-1, rtol=1e-1)

    print("KERNEL_OK")
</pallas_src>

<mosaic_0001>
module attributes {stable_mosaic.version = 11 : i64} {
  func.func @_mha_kernel(%arg0: i32, %arg1: i32, %arg2: memref<1x16x128xf32, #tpu.memory_space<vmem>>, %arg3: memref<1x16x128xf32, #tpu.memory_space<vmem>>, %arg4: memref<1x16x128xf32, #tpu.memory_space<vmem>>, %arg5: memref<128x128xf32, #tpu.memory_space<vmem>>, %arg6: memref<128x128xf32, #tpu.memory_space<vmem>>, %arg7: memref<128x128xf32, #tpu.memory_space<vmem>>, %arg8: memref<128x128xf32, #tpu.memory_space<vmem>>, %arg9: memref<1x16x128xf32, #tpu.memory_space<vmem>>, %arg10: memref<1x4x16x16xf32, #tpu.memory_space<vmem>>) attributes {dimension_semantics = [#tpu.dimension_semantics<parallel>, #tpu.dimension_semantics<parallel>], iteration_bounds = array<i64: 2, 1>, scalar_prefetch = 0 : i64, scratch_operands = 0 : i64, tpu.core_type = #tpu.core_type<tc>, window_params = [{transform_indices = @transform_0, window_bounds = array<i64: 1, 16, 128>}, {transform_indices = @transform_1, window_bounds = array<i64: 1, 16, 128>}, {transform_indices = @transform_2, window_bounds = array<i64: 1, 16, 128>}, {pipeline_mode = #tpu.pipeline_mode<synchronous>, transform_indices = @transform_3, window_bounds = array<i64: 128, 128>}, {pipeline_mode = #tpu.pipeline_mode<synchronous>, transform_indices = @transform_4, window_bounds = array<i64: 128, 128>}, {pipeline_mode = #tpu.pipeline_mode<synchronous>, transform_indices = @transform_5, window_bounds = array<i64: 128, 128>}, {pipeline_mode = #tpu.pipeline_mode<synchronous>, transform_indices = @transform_6, window_bounds = array<i64: 128, 128>}, {transform_indices = @transform_7, window_bounds = array<i64: 1, 16, 128>}, {transform_indices = @transform_8, window_bounds = array<i64: 1, 4, 16, 16>}]} {
    %c0 = arith.constant 0 : index
    %c0_0 = arith.constant 0 : index
    %c0_1 = arith.constant 0 : index
    %0 = vector.load %arg2[%c0, %c0_0, %c0_1] : memref<1x16x128xf32, #tpu.memory_space<vmem>>, vector<1x16x128xf32>
    %1 = vector.shape_cast %0 : vector<1x16x128xf32> to vector<16x128xf32>
    %c0_2 = arith.constant 0 : index
    %c0_3 = arith.constant 0 : index
    %c0_4 = arith.constant 0 : index
    %2 = vector.load %arg3[%c0_2, %c0_3, %c0_4] : memref<1x16x128xf32, #tpu.memory_space<vmem>>, vector<1x16x128xf32>
    %3 = vector.shape_cast %2 : vector<1x16x128xf32> to vector<16x128xf32>
    %c0_5 = arith.constant 0 : index
    %c0_6 = arith.constant 0 : index
    %c0_7 = arith.constant 0 : index
    %4 = vector.load %arg4[%c0_5, %c0_6, %c0_7] : memref<1x16x128xf32, #tpu.memory_space<vmem>>, vector<1x16x128xf32>
    %5 = vector.shape_cast %4 : vector<1x16x128xf32> to vector<16x128xf32>
    %c0_8 = arith.constant 0 : index
    %c0_9 = arith.constant 0 : index
    %6 = vector.load %arg5[%c0_8, %c0_9] : memref<128x128xf32, #tpu.memory_space<vmem>>, vector<128x128xf32>
    %cst = arith.constant dense<0.000000e+00> : vector<16x128xf32>
    %7 = tpu.matmul %1, %6, %cst {dimension_numbers = #tpu.dot_dimension_numbers<[1], [0], [0], [1], [0, 0, 1, 1], [], []>} : vector<16x128xf32>, vector<128x128xf32>, vector<16x128xf32> -> vector<16x128xf32>
    %c0_10 = arith.constant 0 : index
    %c0_11 = arith.constant 0 : index
    %8 = vector.load %arg6[%c0_10, %c0_11] : memref<128x128xf32, #tpu.memory_space<vmem>>, vector<128x128xf32>
    %cst_12 = arith.constant dense<0.000000e+00> : vector<16x128xf32>
    %9 = tpu.matmul %3, %8, %cst_12 {dimension_numbers = #tpu.dot_dimension_numbers<[1], [0], [0], [1], [0, 0, 1, 1], [], []>} : vector<16x128xf32>, vector<128x128xf32>, vector<16x128xf32> -> vector<16x128xf32>
    %c0_13 = arith.constant 0 : index
    %c0_14 = arith.constant 0 : index
    %10 = vector.load %arg7[%c0_13, %c0_14] : memref<128x128xf32, #tpu.memory_space<vmem>>, vector<128x128xf32>
    %cst_15 = arith.constant dense<0.000000e+00> : vector<16x128xf32>
    %11 = tpu.matmul %5, %10, %cst_15 {dimension_numbers = #tpu.dot_dimension_numbers<[1], [0], [0], [1], [0, 0, 1, 1], [], []>} : vector<16x128xf32>, vector<128x128xf32>, vector<16x128xf32> -> vector<16x128xf32>
    %12 = vector.extract_strided_slice %7 {offsets = [0, 0], sizes = [16, 32], strides = [1, 1]} : vector<16x128xf32> to vector<16x32xf32>
    %13 = vector.extract_strided_slice %9 {offsets = [0, 0], sizes = [16, 32], strides = [1, 1]} : vector<16x128xf32> to vector<16x32xf32>
    %14 = vector.extract_strided_slice %11 {offsets = [0, 0], sizes = [16, 32], strides = [1, 1]} : vector<16x128xf32> to vector<16x32xf32>
    "tpu.trace_start"() <{level = 10 : i32, message = "qd,kd->qk"}> : () -> ()
    %cst_16 = arith.constant dense<0.000000e+00> : vector<16x16xf32>
    %15 = tpu.matmul %12, %13, %cst_16 {dimension_numbers = #tpu.dot_dimension_numbers<[1], [1], [0], [0], [0, 0, 1, 0], [], []>} : vector<16x32xf32>, vector<16x32xf32>, vector<16x16xf32> -> vector<16x16xf32>
    "tpu.trace_stop"() : () -> ()
    %cst_17 = arith.constant dense<0xFF800000> : vector<16xf32>
    %16 = vector.multi_reduction <maximumf>, %15, %cst_17 [1] : vector<16x16xf32> to vector<16xf32>
    %17 = vector.shape_cast %16 : vector<16xf32> to vector<16x1xf32>
    %18 = vector.broadcast %17 : vector<16x1xf32> to vector<16x16xf32>
    %19 = arith.subf %15, %18 : vector<16x16xf32>
    %20 = math.exp %19 : vector<16x16xf32>
    %cst_18 = arith.constant dense<0.000000e+00> : vector<16xf32>
    %21 = vector.multi_reduction <add>, %20, %cst_18 [1] : vector<16x16xf32> to vector<16xf32>
    %22 = vector.shape_cast %21 : vector<16xf32> to vector<16x1xf32>
    %23 = vector.broadcast %22 : vector<16x1xf32> to vector<16x16xf32>
    %24 = arith.divf %20, %23 : vector<16x16xf32>
    %c0_19 = arith.constant 0 : index
    %c0_20 = arith.constant 0 : index
    %c0_21 = arith.constant 0 : index
    %c0_22 = arith.constant 0 : index
    %25 = vector.load %arg10[%c0_19, %c0_20, %c0_21, %c0_22] : memref<1x4x16x16xf32, #tpu.memory_space<vmem>>, vector<1x1x16x16xf32>
    %26 = vector.shape_cast %25 : vector<1x1x16x16xf32> to vector<16x16xf32>
    %27 = vector.shape_cast %24 : vector<16x16xf32> to vector<1x1x16x16xf32>
    tpu.vector_store %arg10[%c0_19, %c0_20, %c0_21, %c0_22], %27 {strides = array<i32>} : memref<1x4x16x16xf32, #tpu.memory_space<vmem>>, vector<1x1x16x16xf32>,
    %cst_23 = arith.constant dense<0.000000e+00> : vector<16x32xf32>
    %28 = tpu.matmul %24, %14, %cst_23 {dimension_numbers = #tpu.dot_dimension_numbers<[1], [0], [0], [1], [0, 0, 1, 1], [], []>} : vector<16x16xf32>, vector<16x32xf32>, vector<16x32xf32> -> vector<16x32xf32>
    %29 = vector.extract_strided_slice %7 {offsets = [0, 32], sizes = [16, 32], strides = [1, 1]} : vector<16x128xf32> to vector<16x32xf32>
    %30 = vector.extract_strided_slice %9 {offsets = [0, 32], sizes = [16, 32], strides = [1, 1]} : vector<16x128xf32> to vector<16x32xf32>
    %31 = vector.extract_strided_slice %11 {offsets = [0, 32], sizes = [16, 32], strides = [1, 1]} : vector<16x128xf32> to vector<16x32xf32>
    "tpu.trace_start"() <{level = 10 : i32, message = "qd,kd->qk"}> : () -> ()
    %cst_24 = arith.constant dense<0.000000e+00> : vector<16x16xf32>
    %32 = tpu.matmul %29, %30, %cst_24 {dimension_numbers = #tpu.dot_dimension_numbers<[1], [1], [0], [0], [0, 0, 1, 0], [], []>} : vector<16x32xf32>, vector<16x32xf32>, vector<16x16xf32> -> vector<16x16xf32>
    "tpu.trace_stop"() : () -> ()
    %cst_25 = arith.constant dense<0xFF800000> : vector<16xf32>
    %33 = vector.multi_reduction <maximumf>, %32, %cst_25 [1] : vector<16x16xf32> to vector<16xf32>
    %34 = vector.shape_cast %33 : vector<16xf32> to vector<16x1xf32>
    %35 = vector.broadcast %34 : vector<16x1xf32> to vector<16x16xf32>
    %36 = arith.subf %32, %35 : vector<16x16xf32>
    %37 = math.exp %36 : vector<16x16xf32>
    %cst_26 = arith.constant dense<0.000000e+00> : vector<16xf32>
    %38 = vector.multi_reduction <add>, %37, %cst_26 [1] : vector<16x16xf32> to vector<16xf32>
    %39 = vector.shape_cast %38 : vector<16xf32> to vector<16x1xf32>
    %40 = vector.broadcast %39 : vector<16x1xf32> to vector<16x16xf32>
    %41 = arith.divf %37, %40 : vector<16x16xf32>
    %c0_27 = arith.constant 0 : index
    %c1 = arith.constant 1 : index
    %c0_28 = arith.constant 0 : index
    %c0_29 = arith.constant 0 : index
    %42 = vector.load %arg10[%c0_27, %c1, %c0_28, %c0_29] : memref<1x4x16x16xf32, #tpu.memory_space<vmem>>, vector<1x1x16x16xf32>
    %43 = vector.shape_cast %42 : vector<1x1x16x16xf32> to vector<16x16xf32>
    %44 = vector.shape_cast %41 : vector<16x16xf32> to vector<1x1x16x16xf32>
    tpu.vector_store %arg10[%c0_27, %c1, %c0_28, %c0_29], %44 {strides = array<i32>} : memref<1x4x16x16xf32, #tpu.memory_space<vmem>>, vector<1x1x16x16xf32>,
    %cst_30 = arith.constant dense<0.000000e+00> : vector<16x32xf32>
    %45 = tpu.matmul %41, %31, %cst_30 {dimension_numbers = #tpu.dot_dimension_numbers<[1], [0], [0], [1], [0, 0, 1, 1], [], []>} : vector<16x16xf32>, vector<16x32xf32>, vector<16x32xf32> -> vector<16x32xf32>
    %46 = vector.extract_strided_slice %7 {offsets = [0, 64], sizes = [16, 32], strides = [1, 1]} : vector<16x128xf32> to vector<16x32xf32>
    %47 = vector.extract_strided_slice %9 {offsets = [0, 64], sizes = [16, 32], strides = [1, 1]} : vector<16x128xf32> to vector<16x32xf32>
    %48 = vector.extract_strided_slice %11 {offsets = [0, 64], sizes = [16, 32], strides = [1, 1]} : vector<16x128xf32> to vector<16x32xf32>
    "tpu.trace_start"() <{level = 10 : i32, message = "qd,kd->qk"}> : () -> ()
    %cst_31 = arith.constant dense<0.000000e+00> : vector<16x16xf32>
    %49 = tpu.matmul %46, %47, %cst_31 {dimension_numbers = #tpu.dot_dimension_numbers<[1], [1], [0], [0], [0, 0, 1, 0], [], []>} : vector<16x32xf32>, vector<16x32xf32>, vector<16x16xf32> -> vector<16x16xf32>
    "tpu.trace_stop"() : () -> ()
    %cst_32 = arith.constant dense<0xFF800000> : vector<16xf32>
    %50 = vector.multi_reduction <maximumf>, %49, %cst_32 [1] : vector<16x16xf32> to vector<16xf32>
    %51 = vector.shape_cast %50 : vector<16xf32> to vector<16x1xf32>
    %52 = vector.broadcast %51 : vector<16x1xf32> to vector<16x16xf32>
    %53 = arith.subf %49, %52 : vector<16x16xf32>
    %54 = math.exp %53 : vector<16x16xf32>
    %cst_33 = arith.constant dense<0.000000e+00> : vector<16xf32>
    %55 = vector.multi_reduction <add>, %54, %cst_33 [1] : vector<16x16xf32> to vector<16xf32>
    %56 = vector.shape_cast %55 : vector<16xf32> to vector<16x1xf32>
    %57 = vector.broadcast %56 : vector<16x1xf32> to vector<16x16xf32>
    %58 = arith.divf %54, %57 : vector<16x16xf32>
    %c0_34 = arith.constant 0 : index
    %c2 = arith.constant 2 : index
    %c0_35 = arith.constant 0 : index
    %c0_36 = arith.constant 0 : index
    %59 = vector.load %arg10[%c0_34, %c2, %c0_35, %c0_36] : memref<1x4x16x16xf32, #tpu.memory_space<vmem>>, vector<1x1x16x16xf32>
    %60 = vector.shape_cast %59 : vector<1x1x16x16xf32> to vector<16x16xf32>
    %61 = vector.shape_cast %58 : vector<16x16xf32> to vector<1x1x16x16xf32>
    tpu.vector_store %arg10[%c0_34, %c2, %c0_35, %c0_36], %61 {strides = array<i32>} : memref<1x4x16x16xf32, #tpu.memory_space<vmem>>, vector<1x1x16x16xf32>,
    %cst_37 = arith.constant dense<0.000000e+00> : vector<16x32xf32>
    %62 = tpu.matmul %58, %48, %cst_37 {dimension_numbers = #tpu.dot_dimension_numbers<[1], [0], [0], [1], [0, 0, 1, 1], [], []>} : vector<16x16xf32>, vector<16x32xf32>, vector<16x32xf32> -> vector<16x32xf32>
    %63 = vector.extract_strided_slice %7 {offsets = [0, 96], sizes = [16, 32], strides = [1, 1]} : vector<16x128xf32> to vector<16x32xf32>
    %64 = vector.extract_strided_slice %9 {offsets = [0, 96], sizes = [16, 32], strides = [1, 1]} : vector<16x128xf32> to vector<16x32xf32>
    %65 = vector.extract_strided_slice %11 {offsets = [0, 96], sizes = [16, 32], strides = [1, 1]} : vector<16x128xf32> to vector<16x32xf32>
    "tpu.trace_start"() <{level = 10 : i32, message = "qd,kd->qk"}> : () -> ()
    %cst_38 = arith.constant dense<0.000000e+00> : vector<16x16xf32>
    %66 = tpu.matmul %63, %64, %cst_38 {dimension_numbers = #tpu.dot_dimension_numbers<[1], [1], [0], [0], [0, 0, 1, 0], [], []>} : vector<16x32xf32>, vector<16x32xf32>, vector<16x16xf32> -> vector<16x16xf32>
    "tpu.trace_stop"() : () -> ()
    %cst_39 = arith.constant dense<0xFF800000> : vector<16xf32>
    %67 = vector.multi_reduction <maximumf>, %66, %cst_39 [1] : vector<16x16xf32> to vector<16xf32>
    %68 = vector.shape_cast %67 : vector<16xf32> to vector<16x1xf32>
    %69 = vector.broadcast %68 : vector<16x1xf32> to vector<16x16xf32>
    %70 = arith.subf %66, %69 : vector<16x16xf32>
    %71 = math.exp %70 : vector<16x16xf32>
    %cst_40 = arith.constant dense<0.000000e+00> : vector<16xf32>
    %72 = vector.multi_reduction <add>, %71, %cst_40 [1] : vector<16x16xf32> to vector<16xf32>
    %73 = vector.shape_cast %72 : vector<16xf32> to vector<16x1xf32>
    %74 = vector.broadcast %73 : vector<16x1xf32> to vector<16x16xf32>
    %75 = arith.divf %71, %74 : vector<16x16xf32>
    %c0_41 = arith.constant 0 : index
    %c3 = arith.constant 3 : index
    %c0_42 = arith.constant 0 : index
    %c0_43 = arith.constant 0 : index
    %76 = vector.load %arg10[%c0_41, %c3, %c0_42, %c0_43] : memref<1x4x16x16xf32, #tpu.memory_space<vmem>>, vector<1x1x16x16xf32>
    %77 = vector.shape_cast %76 : vector<1x1x16x16xf32> to vector<16x16xf32>
    %78 = vector.shape_cast %75 : vector<16x16xf32> to vector<1x1x16x16xf32>
    tpu.vector_store %arg10[%c0_41, %c3, %c0_42, %c0_43], %78 {strides = array<i32>} : memref<1x4x16x16xf32, #tpu.memory_space<vmem>>, vector<1x1x16x16xf32>,
    %cst_44 = arith.constant dense<0.000000e+00> : vector<16x32xf32>
    %79 = tpu.matmul %75, %65, %cst_44 {dimension_numbers = #tpu.dot_dimension_numbers<[1], [0], [0], [1], [0, 0, 1, 1], [], []>} : vector<16x16xf32>, vector<16x32xf32>, vector<16x32xf32> -> vector<16x32xf32>
    %80 = tpu.concatenate %28, %45, %62, %79 in 1 : vector<16x32xf32>, vector<16x32xf32>, vector<16x32xf32>, vector<16x32xf32> -> vector<16x128xf32>
    %c0_45 = arith.constant 0 : index
    %c0_46 = arith.constant 0 : index
    %81 = vector.load %arg8[%c0_45, %c0_46] : memref<128x128xf32, #tpu.memory_space<vmem>>, vector<128x128xf32>
    %cst_47 = arith.constant dense<0.000000e+00> : vector<16x128xf32>
    %82 = tpu.matmul %80, %81, %cst_47 {dimension_numbers = #tpu.dot_dimension_numbers<[1], [0], [0], [1], [0, 0, 1, 1], [], []>} : vector<16x128xf32>, vector<128x128xf32>, vector<16x128xf32> -> vector<16x128xf32>
    %83 = arith.addf %82, %1 : vector<16x128xf32>
    %cst_48 = arith.constant dense<0.000000e+00> : vector<16xf32>
    %84 = vector.multi_reduction <add>, %83, %cst_48 [1] : vector<16x128xf32> to vector<16xf32>
    %85 = vector.shape_cast %84 : vector<16xf32> to vector<16x1xf32>
    %cst_49 = arith.constant 1.280000e+02 : f32
    %86 = vector.broadcast %cst_49 : f32 to vector<16x1xf32>
    %87 = arith.divf %85, %86 : vector<16x1xf32>
    %88 = vector.broadcast %87 : vector<16x1xf32> to vector<16x128xf32>
    %89 = arith.subf %83, %88 : vector<16x128xf32>
    %90 = arith.mulf %89, %89 : vector<16x128xf32>
    %cst_50 = arith.constant dense<0.000000e+00> : vector<16xf32>
    %91 = vector.multi_reduction <add>, %90, %cst_50 [1] : vector<16x128xf32> to vector<16xf32>
    %92 = vector.shape_cast %91 : vector<16xf32> to vector<16x1xf32>
    %cst_51 = arith.constant 1.280000e+02 : f32
    %93 = vector.broadcast %cst_51 : f32 to vector<16x1xf32>
    %94 = arith.divf %92, %93 : vector<16x1xf32>
    %95 = vector.broadcast %87 : vector<16x1xf32> to vector<16x128xf32>
    %96 = arith.subf %83, %95 : vector<16x128xf32>
    %cst_52 = arith.constant 9.99999974E-6 : f32
    %97 = vector.broadcast %cst_52 : f32 to vector<16x1xf32>
    %98 = arith.addf %94, %97 : vector<16x1xf32>
    %99 = math.rsqrt %98 : vector<16x1xf32>
    %100 = vector.broadcast %99 : vector<16x1xf32> to vector<16x128xf32>
    %101 = arith.mulf %96, %100 : vector<16x128xf32>
    %c0_53 = arith.constant 0 : index
    %c0_54 = arith.constant 0 : index
    %c0_55 = arith.constant 0 : index
    %102 = vector.load %arg9[%c0_53, %c0_54, %c0_55] : memref<1x16x128xf32, #tpu.memory_space<vmem>>, vector<1x16x128xf32>
    %103 = vector.shape_cast %102 : vector<1x16x128xf32> to vector<16x128xf32>
    %104 = vector.shape_cast %101 : vector<16x128xf32> to vector<1x16x128xf32>
    tpu.vector_store %arg9[%c0_53, %c0_54, %c0_55], %104 {strides = array<i32>} : memref<1x16x128xf32, #tpu.memory_space<vmem>>, vector<1x16x128xf32>,
    return
  }
  func.func @transform_0(%arg0: i32, %arg1: i32) -> (i32, i32, i32) {
    %c0_i32 = arith.constant 0 : i32
    %c0_i32_0 = arith.constant 0 : i32
    return %arg0, %arg1, %c0_i32 : i32, i32, i32
  }
  func.func @transform_1(%arg0: i32, %arg1: i32) -> (i32, i32, i32) {
    %c0_i32 = arith.constant 0 : i32
    %c0_i32_0 = arith.constant 0 : i32
    %c0_i32_1 = arith.constant 0 : i32
    return %arg0, %c0_i32, %c0_i32_0 : i32, i32, i32
  }
  func.func @transform_2(%arg0: i32, %arg1: i32) -> (i32, i32, i32) {
    %c0_i32 = arith.constant 0 : i32
    %c0_i32_0 = arith.constant 0 : i32
    %c0_i32_1 = arith.constant 0 : i32
    return %arg0, %c0_i32, %c0_i32_0 : i32, i32, i32
  }
  func.func @transform_3(%arg0: i32, %arg1: i32) -> (i32, i32) {
    %c0_i32 = arith.constant 0 : i32
    %c0_i32_0 = arith.constant 0 : i32
    %c0_i32_1 = arith.constant 0 : i32
    return %c0_i32, %c0_i32_0 : i32, i32
  }
  func.func @transform_4(%arg0: i32, %arg1: i32) -> (i32, i32) {
    %c0_i32 = arith.constant 0 : i32
    %c0_i32_0 = arith.constant 0 : i32
    %c0_i32_1 = arith.constant 0 : i32
    return %c0_i32, %c0_i32_0 : i32, i32
  }
  func.func @transform_5(%arg0: i32, %arg1: i32) -> (i32, i32) {
    %c0_i32 = arith.constant 0 : i32
    %c0_i32_0 = arith.constant 0 : i32
    %c0_i32_1 = arith.constant 0 : i32
    return %c0_i32, %c0_i32_0 : i32, i32
  }
  func.func @transform_6(%arg0: i32, %arg1: i32) -> (i32, i32) {
    %c0_i32 = arith.constant 0 : i32
    %c0_i32_0 = arith.constant 0 : i32
    %c0_i32_1 = arith.constant 0 : i32
    return %c0_i32, %c0_i32_0 : i32, i32
  }
  func.func @transform_7(%arg0: i32, %arg1: i32) -> (i32, i32, i32) {
    %c0_i32 = arith.constant 0 : i32
    %c0_i32_0 = arith.constant 0 : i32
    return %arg0, %arg1, %c0_i32 : i32, i32, i32
  }
  func.func @transform_8(%arg0: i32, %arg1: i32) -> (i32, i32, i32, i32) {
    %c0_i32 = arith.constant 0 : i32
    %c0_i32_0 = arith.constant 0 : i32
    %c0_i32_1 = arith.constant 0 : i32
    return %arg0, %c0_i32, %arg1, %c0_i32_0 : i32, i32, i32, i32
  }
}

</mosaic_0001>

<llo_original>
// kernel: tpu_custom_call.1
$region0: #{tpu_custom_call.1}
  #allocation0 [shape = 'u32[]', space=smem, size = 0x4, offset = 0x4, fixed_abs, tag = 'smem constant byte address 0x4 - core index']
  #allocation1 [shape = 'u32[144,128]{1,0:T(1,128)}', space=vmem, size = 0x12000, scoped, tag = 'internal scratch']
  %s0 = inlined_call_operand.hbm [shape: f32[2,16,128], index: 0, kind: input, shape index: {}]
  %s1 = inlined_call_operand.hbm [shape: f32[2,16,128], index: 1, kind: input, shape index: {}]
  %s2 = inlined_call_operand.hbm [shape: f32[2,16,128], index: 2, kind: input, shape index: {}]
  %s3 = inlined_call_operand.hbm [shape: f32[128,128], index: 3, kind: input, shape index: {}]
  %s4 = inlined_call_operand.hbm [shape: f32[128,128], index: 4, kind: input, shape index: {}]
  %s5 = inlined_call_operand.hbm [shape: f32[128,128], index: 5, kind: input, shape index: {}]
  %s6 = inlined_call_operand.hbm [shape: f32[128,128], index: 6, kind: input, shape index: {}]
  %s7 = inlined_call_operand.hbm [shape: f32[2,16,128], index: 7, kind: output, shape index: {0}]
  %s8 = inlined_call_operand.hbm [shape: f32[2,4,16,16], index: 8, kind: output, shape index: {1}]
  %9 = xla_tuple %s7, %s8
  %s10 = sld [smem:[#allocation0]]
  $region97: #{tpu_custom_call.1} parent=0
    _
  %s12 = ssub.s32 1, %s10
  %s13 = scalar_select 0, %s12, %s10
  $region1: #{tpu_custom_call.1} parent=0
    #allocation2 [shape = 'u8[16384]{0}', space=vmem, size = 0x4000, scoped, tag = 'input window, operand 0']
    #allocation3 [shape = 's32[2]{0}', space=sflag, size = 0x8, scoped, tag = 'scoped memory for tpu_custom_call.1']
    #allocation4 [shape = 's32[2]{0}', space=sflag, size = 0x8, scoped, tag = 'scoped memory for tpu_custom_call.1']
    #allocation5 [shape = 'u8[16384]{0}', space=vmem, size = 0x4000, scoped, tag = 'input window, operand 1']
    #allocation6 [shape = 's32[2]{0}', space=sflag, size = 0x8, scoped, tag = 'scoped memory for tpu_custom_call.1']
    #allocation7 [shape = 'u8[16384]{0}', space=vmem, size = 0x4000, scoped, tag = 'input window, operand 2']
    #allocation8 [shape = 'u8[65536]{0}', space=vmem, size = 0x10000, scoped, tag = 'input window, operand 3, single buffered']
    #allocation9 [shape = 's32[1]{0}', space=sflag, size = 0x4, scoped, tag = 'scoped memory for tpu_custom_call.1']
    #allocation10 [shape = 'u8[65536]{0}', space=vmem, size = 0x10000, scoped, tag = 'input window, operand 4, single buffered']
    #allocation11 [shape = 'u8[65536]{0}', space=vmem, size = 0x10000, scoped, tag = 'input window, operand 5, single buffered']
    #allocation12 [shape = 's32[1]{0}', space=sflag, size = 0x4, scoped, tag = 'scoped memory for tpu_custom_call.1']
    #allocation13 [shape = 'u8[65536]{0}', space=vmem, size = 0x10000, scoped, tag = 'input window, operand 6, single buffered']
    #allocation14 [shape = 'u8[16384]{0}', space=vmem, size = 0x4000, scoped, tag = 'output window, operand 0']
    #allocation15 [shape = 'u8[65536]{0}', space=vmem, size = 0x10000, scoped, tag = 'output window, operand 1']
    #allocation16 [shape = 's32[2]{0}', space=sflag, size = 0x8, scoped, tag = 'scoped memory for tpu_custom_call.1']
    %14 = vsyncpa [#allocation3], 0
    %s15 = scalar_lea.sflag [#allocation3], 1
    %16 = vsyncpa %s15, 0
    %17 = vsyncpa [#allocation6], 0
    %s18 = scalar_lea.sflag [#allocation6], 1
    %19 = vsyncpa %s18, 0
    %20 = vsyncpa [#allocation9], 0
    %21 = vsyncpa [#allocation12], 0
    %22 = vsyncpa [#allocation4], 0
    %s23 = scalar_lea.sflag [#allocation4], 1
    %24 = vsyncpa %s23, 0
    %25 = vsyncpa [#allocation16], 0
    %s26 = scalar_lea.sflag [#allocation16], 1
    %27 = vsyncpa %s26, 0
    loop: start=0, step=1, limit=4
    $region2: #{tpu_custom_call.1} parent=1 // loop_pre_header
      _
    $region3: #{tpu_custom_call.1} parent=1 // loop_header
      %s29 = sphi 0, %s33
      %p30 = scmp.ge.s32.totalorder %s29, 4
      %s36 = sphi 0, %s48
      %s37 = sphi 0, %s44
      %s38 = sphi 0, %s36
      %s39 = sphi 0, %s37
      %s40 = sphi 0, %s38
      %s41 = sphi 0, %s39
      %s53 = sphi 0, %s55
      %s56 = sphi 0, %s53
      %s57 = sphi 0, %s56
      %s73 = sphi 0, %s57
      %s79 = sphi 0, %s81
      %s82 = sphi 0, %s79
      %s83 = sphi 0, %s82
      %s99 = sphi 0, %s83
      %s105 = sphi 0, %s107
      %s108 = sphi 0, %s105
      %s109 = sphi 0, %s108
      %s125 = sphi 0, %s109
      %s129 = sphi 0, %s129
      %s131 = sphi 0, %s129
      %s132 = sphi 0, %s131
      %s146 = sphi 0, %s132
      %s150 = sphi 0, %s150
      %s152 = sphi 0, %s150
      %s153 = sphi 0, %s152
      %s167 = sphi 0, %s153
      %s171 = sphi 0, %s171
      %s173 = sphi 0, %s171
      %s174 = sphi 0, %s173
      %s188 = sphi 0, %s174
      %s192 = sphi 0, %s192
      %s194 = sphi 0, %s192
      %s195 = sphi 0, %s194
      %s209 = sphi 0, %s195
      %s217 = sphi 0, %s219
      %s220 = sphi 0, %s217
      %s221 = sphi 0, %s220
      %s237 = sphi 0, %s221
      %s245 = sphi 0, %s247
      %s248 = sphi 0, %s245
      %s249 = sphi 0, %s248
      %s265 = sphi 0, %s249
    $region4: #{tpu_custom_call.1} parent=1 // loop_header_branch
      %32 = sbr.rel (%p30) target = $region8
    $region5: #{tpu_custom_call.1} parent=1 // loop_body
      %s34 = ssub.s32 %s29, 1
      %s35 = ssub.s32 %s29, 2
      %s42 = sadd.s32 1, %s37
      %p43 = scmp.ge.s32.totalorder %s42, 1
      %s44 = scalar_select %p43, 0, %s42
      %s45 = sadd.s32 1, %s36
      %s46 = scalar_select %p43, %s45, %s36
      %p47 = scmp.ge.s32.totalorder %s46, 2
      %s48 = scalar_select %p47, 0, %s46
      %s49 = ssub.s32 %s36, %s48
      %s50 = ssub.s32 %s37, %s44
      %s51 = sor.u32 %s49, %s50
      %p52 = scmp.eq.s32.totalorder %s51, 0
      %s54 = sadd.s32 %s53, 1
      %s55 = scalar_select %p52, %s53, %s54
      %p58 = pneg %p52
      %p59 = scmp.eq.s32.totalorder %s29, 1
      %p60 = por %p58, %p59
      %p61 = scmp.ne.s32.totalorder %s53, %s56
      %p62 = scmp.eq.s32.totalorder %s29, 0
      %p63 = por %p61, %p62
      %p64 = scmp.ne.s32.totalorder %s53, %s56
      %p65 = scmp.eq.s32.totalorder %s34, 1
      %p66 = por %p64, %p65
      %p67 = scmp.ne.s32.totalorder %s56, %s57
      %p68 = scmp.eq.s32.totalorder %s34, 0
      %p69 = por %p67, %p68
      %p70 = scmp.ne.s32.totalorder %s56, %s57
      %p71 = scmp.eq.s32.totalorder %s35, 1
      %p72 = por %p70, %p71
      %p74 = scmp.ne.s32.totalorder %s57, %s73
      %p75 = scmp.eq.s32.totalorder %s35, 0
      %p76 = por %p74, %p75
      %s77 = ssub.s32 %s36, %s48
      %p78 = scmp.eq.s32.totalorder %s77, 0
      %s80 = sadd.s32 %s79, 1
      %s81 = scalar_select %p78, %s79, %s80
      %p84 = pneg %p78
      %p85 = scmp.eq.s32.totalorder %s29, 1
      %p86 = por %p84, %p85
      %p87 = scmp.ne.s32.totalorder %s79, %s82
      %p88 = scmp.eq.s32.totalorder %s29, 0
      %p89 = por %p87, %p88
      %p90 = scmp.ne.s32.totalorder %s79, %s82
      %p91 = scmp.eq.s32.totalorder %s34, 1
      %p92 = por %p90, %p91
      %p93 = scmp.ne.s32.totalorder %s82, %s83
      %p94 = scmp.eq.s32.totalorder %s34, 0
      %p95 = por %p93, %p94
      %p96 = scmp.ne.s32.totalorder %s82, %s83
      %p97 = scmp.eq.s32.totalorder %s35, 1
      %p98 = por %p96, %p97
      %p100 = scmp.ne.s32.totalorder %s83, %s99
      %p101 = scmp.eq.s32.totalorder %s35, 0
      %p102 = por %p100, %p101
      %s103 = ssub.s32 %s36, %s48
      %p104 = scmp.eq.s32.totalorder %s103, 0
      %s106 = sadd.s32 %s105, 1
      %s107 = scalar_select %p104, %s105, %s106
      %p110 = pneg %p104
      %p111 = scmp.eq.s32.totalorder %s29, 1
      %p112 = por %p110, %p111
      %p113 = scmp.ne.s32.totalorder %s105, %s108
      %p114 = scmp.eq.s32.totalorder %s29, 0
      %p115 = por %p113, %p114
      %p116 = scmp.ne.s32.totalorder %s105, %s108
      %p117 = scmp.eq.s32.totalorder %s34, 1
      %p118 = por %p116, %p117
      %p119 = scmp.ne.s32.totalorder %s108, %s109
      %p120 = scmp.eq.s32.totalorder %s34, 0
      %p121 = por %p119, %p120
      %p122 = scmp.ne.s32.totalorder %s108, %s109
      %p123 = scmp.eq.s32.totalorder %s35, 1
      %p124 = por %p122, %p123
      %p126 = scmp.ne.s32.totalorder %s109, %s125
      %p127 = scmp.eq.s32.totalorder %s35, 0
      %p128 = por %p126, %p127
      %s130 = sadd.s32 %s129, 1
      %p133 = scmp.eq.s32.totalorder %s29, 1
      %p134 = scmp.ne.s32.totalorder %s129, %s131
      %p135 = scmp.eq.s32.totalorder %s29, 0
      %p136 = por %p134, %p135
      %p137 = scmp.ne.s32.totalorder %s129, %s131
      %p138 = scmp.eq.s32.totalorder %s34, 1
      %p139 = por %p137, %p138
      %p140 = scmp.ne.s32.totalorder %s131, %s132
      %p141 = scmp.eq.s32.totalorder %s34, 0
      %p142 = por %p140, %p141
      %p143 = scmp.ne.s32.totalorder %s131, %s132
      %p144 = scmp.eq.s32.totalorder %s35, 1
      %p145 = por %p143, %p144
      %p147 = scmp.ne.s32.totalorder %s132, %s146
      %p148 = scmp.eq.s32.totalorder %s35, 0
      %p149 = por %p147, %p148
      %s151 = sadd.s32 %s150, 1
      %p154 = scmp.eq.s32.totalorder %s29, 1
      %p155 = scmp.ne.s32.totalorder %s150, %s152
      %p156 = scmp.eq.s32.totalorder %s29, 0
      %p157 = por %p155, %p156
      %p158 = scmp.ne.s32.totalorder %s150, %s152
      %p159 = scmp.eq.s32.totalorder %s34, 1
      %p160 = por %p158, %p159
      %p161 = scmp.ne.s32.totalorder %s152, %s153
      %p162 = scmp.eq.s32.totalorder %s34, 0
      %p163 = por %p161, %p162
      %p164 = scmp.ne.s32.totalorder %s152, %s153
      %p165 = scmp.eq.s32.totalorder %s35, 1
      %p166 = por %p164, %p165
      %p168 = scmp.ne.s32.totalorder %s153, %s167
      %p169 = scmp.eq.s32.totalorder %s35, 0
      %p170 = por %p168, %p169
      %s172 = sadd.s32 %s171, 1
      %p175 = scmp.eq.s32.totalorder %s29, 1
      %p176 = scmp.ne.s32.totalorder %s171, %s173
      %p177 = scmp.eq.s32.totalorder %s29, 0
      %p178 = por %p176, %p177
      %p179 = scmp.ne.s32.totalorder %s171, %s173
      %p180 = scmp.eq.s32.totalorder %s34, 1
      %p181 = por %p179, %p180
      %p182 = scmp.ne.s32.totalorder %s173, %s174
      %p183 = scmp.eq.s32.totalorder %s34, 0
      %p184 = por %p182, %p183
      %p185 = scmp.ne.s32.totalorder %s173, %s174
      %p186 = scmp.eq.s32.totalorder %s35, 1
      %p187 = por %p185, %p186
      %p189 = scmp.ne.s32.totalorder %s174, %s188
      %p190 = scmp.eq.s32.totalorder %s35, 0
      %p191 = por %p189, %p190
      %s193 = sadd.s32 %s192, 1
      %p196 = scmp.eq.s32.totalorder %s29, 1
      %p197 = scmp.ne.s32.totalorder %s192, %s194
      %p198 = scmp.eq.s32.totalorder %s29, 0
      %p199 = por %p197, %p198
      %p200 = scmp.ne.s32.totalorder %s192, %s194
      %p201 = scmp.eq.s32.totalorder %s34, 1
      %p202 = por %p200, %p201
      %p203 = scmp.ne.s32.totalorder %s194, %s195
      %p204 = scmp.eq.s32.totalorder %s34, 0
      %p205 = por %p203, %p204
      %p206 = scmp.ne.s32.totalorder %s194, %s195
      %p207 = scmp.eq.s32.totalorder %s35, 1
      %p208 = por %p206, %p207
      %p210 = scmp.ne.s32.totalorder %s195, %s209
      %p211 = scmp.eq.s32.totalorder %s35, 0
      %p212 = por %p210, %p211
      %s213 = ssub.s32 %s36, %s48
      %s214 = ssub.s32 %s37, %s44
      %s215 = sor.u32 %s213, %s214
      %p216 = scmp.eq.s32.totalorder %s215, 0
      %s218 = sadd.s32 %s217, 1
      %s219 = scalar_select %p216, %s217, %s218
      %p222 = pneg %p216
      %p223 = scmp.eq.s32.totalorder %s29, 1
      %p224 = por %p222, %p223
      %p225 = scmp.ne.s32.totalorder %s217, %s220
      %p226 = scmp.eq.s32.totalorder %s29, 0
      %p227 = por %p225, %p226
      %p228 = scmp.ne.s32.totalorder %s217, %s220
      %p229 = scmp.eq.s32.totalorder %s34, 1
      %p230 = por %p228, %p229
      %p231 = scmp.ne.s32.totalorder %s220, %s221
      %p232 = scmp.eq.s32.totalorder %s34, 0
      %p233 = por %p231, %p232
      %p234 = scmp.ne.s32.totalorder %s220, %s221
      %p235 = scmp.eq.s32.totalorder %s35, 1
      %p236 = por %p234, %p235
      %p238 = scmp.ne.s32.totalorder %s221, %s237
      %p239 = scmp.eq.s32.totalorder %s35, 0
      %p240 = por %p238, %p239
      %s241 = ssub.s32 %s36, %s48
      %s242 = ssub.s32 %s37, %s44
      %s243 = sor.u32 %s241, %s242
      %p244 = scmp.eq.s32.totalorder %s243, 0
      %s246 = sadd.s32 %s245, 1
      %s247 = scalar_select %p244, %s245, %s246
      %p250 = pneg %p244
      %p251 = scmp.eq.s32.totalorder %s29, 1
      %p252 = por %p250, %p251
      %p253 = scmp.ne.s32.totalorder %s245, %s248
      %p254 = scmp.eq.s32.totalorder %s29, 0
      %p255 = por %p253, %p254
      %p256 = scmp.ne.s32.totalorder %s245, %s248
      %p257 = scmp.eq.s32.totalorder %s34, 1
      %p258 = por %p256, %p257
      %p259 = scmp.ne.s32.totalorder %s248, %s249
      %p260 = scmp.eq.s32.totalorder %s34, 0
      %p261 = por %p259, %p260
      %p262 = scmp.ne.s32.totalorder %s248, %s249
      %p263 = scmp.eq.s32.totalorder %s35, 1
      %p264 = por %p262, %p263
      %p266 = scmp.ne.s32.totalorder %s249, %s265
      %p267 = scmp.eq.s32.totalorder %s35, 0
      %p268 = por %p266, %p267
      %p269 = scmp.le.s32.totalorder 1, %s29
      %p270 = scmp.lt.s32.totalorder %s29, 3
      %p271 = pnand %p269, %p270
      %p272 = pneg %p271
      // Predicated region
      $region9: #{tpu_custom_call.1} parent=5 // pred_check
        _
      $region10: #{tpu_custom_call.1} parent=5 // pred_check_branch
        %274 = sbr.rel (%p271) target = $region12
      $region11: #{tpu_custom_call.1} parent=5 // pred_region
        %s275 = ssub.s32 %s29, 1
        // Predicated region
        $region13: #{tpu_custom_call.1} parent=11 // pred_check
          %p276 = pneg %p142
        $region14: #{tpu_custom_call.1} parent=11 // pred_check_branch
          %278 = sbr.rel (%p276) target = $region16
        $region15: #{tpu_custom_call.1} parent=11 // pred_region
          %s280 = ssub.s32 2048, 2048
          %281 = vsyncadd [#allocation9], %s280
          %s282 = sshll.u32 [#allocation8], 4
          %s283 = int_to_ptr.vmem [resolvable:$true] %s282
          %288 = dma.hbm_to_vmem [thread:$0]  %s3, 2048, %s283, [#allocation9], 128, 128, 8
        $region16: #{tpu_custom_call.1} parent=11 // pred_fallthru
          _
        // Predicated region
        $region17: #{tpu_custom_call.1} parent=11 // pred_check
          %p289 = pneg %p163
        $region18: #{tpu_custom_call.1} parent=11 // pred_check_branch
          %291 = sbr.rel (%p289) target = $region20
        $region19: #{tpu_custom_call.1} parent=11 // pred_region
          %s293 = ssub.s32 2048, 2048
          %294 = vsyncadd [#allocation9], %s293
          %s295 = sshll.u32 [#allocation10], 4
          %s296 = int_to_ptr.vmem [resolvable:$true] %s295
          %301 = dma.hbm_to_vmem [thread:$0]  %s4, 2048, %s296, [#allocation9], 128, 128, 8
        $region20: #{tpu_custom_call.1} parent=11 // pred_fallthru
          _
        // Predicated region
        $region21: #{tpu_custom_call.1} parent=11 // pred_check
          %p302 = pneg %p184
        $region22: #{tpu_custom_call.1} parent=11 // pred_check_branch
          %304 = sbr.rel (%p302) target = $region24
        $region23: #{tpu_custom_call.1} parent=11 // pred_region
          %s306 = ssub.s32 2048, 2048
          %307 = vsyncadd [#allocation12], %s306
          %s308 = sshll.u32 [#allocation11], 4
          %s309 = int_to_ptr.vmem [resolvable:$true] %s308
          %314 = dma.hbm_to_vmem [thread:$0]  %s5, 2048, %s309, [#allocation12], 128, 128, 8
        $region24: #{tpu_custom_call.1} parent=11 // pred_fallthru
          _
        // Predicated region
        $region25: #{tpu_custom_call.1} parent=11 // pred_check
          %p315 = pneg %p205
        $region26: #{tpu_custom_call.1} parent=11 // pred_check_branch
          %317 = sbr.rel (%p315) target = $region28
        $region27: #{tpu_custom_call.1} parent=11 // pred_region
          %s319 = ssub.s32 2048, 2048
          %320 = vsyncadd [#allocation12], %s319
          %s321 = sshll.u32 [#allocation13], 4
          %s322 = int_to_ptr.vmem [resolvable:$true] %s321
          %327 = dma.hbm_to_vmem [thread:$0]  %s6, 2048, %s322, [#allocation12], 128, 128, 8
        $region28: #{tpu_custom_call.1} parent=11 // pred_fallthru
          _
      $region12: #{tpu_custom_call.1} parent=5 // pred_fallthru
        _
      %p328 = scmp.lt.s32.totalorder %s29, 2
      // Predicated region
      $region29: #{tpu_custom_call.1} parent=5 // pred_check
        %p329 = pneg %p328
      $region30: #{tpu_custom_call.1} parent=5 // pred_check_branch
        %331 = sbr.rel (%p329) target = $region32
      $region31: #{tpu_custom_call.1} parent=5 // pred_region
        // Predicated region
        $region33: #{tpu_custom_call.1} parent=31 // pred_check
          %p332 = pneg %p63
        $region34: #{tpu_custom_call.1} parent=31 // pred_check_branch
          %334 = sbr.rel (%p332) target = $region36
        $region35: #{tpu_custom_call.1} parent=31 // pred_region
          %s335 = sand.u32 %s53, 1
          %s336 = scalar_lea.sflag [#allocation3], %s335
          %s337 = sand.u32 %s53, 1
          %s338 = smul.addr %s337, 16
          %s339 = scalar_lea.vmem [#allocation2], %s338
          %s340 = smul.u32 2, %s37
          %s342 = ssub.s32 256, 256
          %343 = vsyncadd %s336, %s342
          %s344 = smul.addr %s36, 2
          %s345 = sadd.s32 %s340, %s344
          %s346 = smul.addr %s345, 128
          %s347 = scalar_lea.hbm %s0, %s346
          %s348 = sshll.u32 %s339, 4
          %s349 = int_to_ptr.vmem [resolvable:$true] %s348
          %354 = dma.hbm_to_vmem [thread:$0]  %s347, 256, %s349, %s336, 128, 128, 8
        $region36: #{tpu_custom_call.1} parent=31 // pred_fallthru
          _
        // Predicated region
        $region37: #{tpu_custom_call.1} parent=31 // pred_check
          %p355 = pneg %p89
        $region38: #{tpu_custom_call.1} parent=31 // pred_check_branch
          %357 = sbr.rel (%p355) target = $region40
        $region39: #{tpu_custom_call.1} parent=31 // pred_region
          %s358 = sand.u32 %s29, 1
          %s359 = scalar_lea.sflag [#allocation6], %s358
          %s360 = sand.u32 %s79, 1
          %s361 = smul.addr %s360, 16
          %s362 = scalar_lea.vmem [#allocation5], %s361
          %s364 = ssub.s32 256, 256
          %365 = vsyncadd %s359, %s364
          %s366 = smul.addr %s36, 2
          %s367 = smul.addr %s366, 128
          %s368 = scalar_lea.hbm %s1, %s367
          %s369 = sshll.u32 %s362, 4
          %s370 = int_to_ptr.vmem [resolvable:$true] %s369
          %375 = dma.hbm_to_vmem [thread:$0]  %s368, 256, %s370, %s359, 128, 128, 8
        $region40: #{tpu_custom_call.1} parent=31 // pred_fallthru
          _
        // Predicated region
        $region41: #{tpu_custom_call.1} parent=31 // pred_check
          %p376 = pneg %p115
        $region42: #{tpu_custom_call.1} parent=31 // pred_check_branch
          %378 = sbr.rel (%p376) target = $region44
        $region43: #{tpu_custom_call.1} parent=31 // pred_region
          %s379 = sand.u32 %s29, 1
          %s380 = scalar_lea.sflag [#allocation6], %s379
          %s381 = sand.u32 %s105, 1
          %s382 = smul.addr %s381, 16
          %s383 = scalar_lea.vmem [#allocation7], %s382
          %s385 = ssub.s32 256, 256
          %386 = vsyncadd %s380, %s385
          %s387 = smul.addr %s36, 2
          %s388 = smul.addr %s387, 128
          %s389 = scalar_lea.hbm %s2, %s388
          %s390 = sshll.u32 %s383, 4
          %s391 = int_to_ptr.vmem [resolvable:$true] %s390
          %396 = dma.hbm_to_vmem [thread:$0]  %s389, 256, %s391, %s380, 128, 128, 8
        $region44: #{tpu_custom_call.1} parent=31 // pred_fallthru
          _
      $region32: #{tpu_custom_call.1} parent=5 // pred_fallthru
        _
      %p397 = scmp.le.s32.totalorder 1, %s29
      %p398 = scmp.lt.s32.totalorder %s29, 3
      %p399 = pnand %p397, %p398
      %p400 = pneg %p399
      // Predicated region
      $region45: #{tpu_custom_call.1} parent=5 // pred_check
        _
      $region46: #{tpu_custom_call.1} parent=5 // pred_check_branch
        %402 = sbr.rel (%p399) target = $region48
      $region47: #{tpu_custom_call.1} parent=5 // pred_region
        %s403 = ssub.s32 %s29, 1
        %s404 = sand.u32 %s56, 1
        %s405 = scalar_lea.sflag [#allocation3], %s404
        %s406 = sand.u32 %s56, 1
        %s407 = smul.addr %s406, 16
        %s408 = scalar_lea.vmem [#allocation2], %s407
        // Predicated region
        $region49: #{tpu_custom_call.1} parent=47 // pred_check
          %p409 = pneg %p69
        $region50: #{tpu_custom_call.1} parent=47 // pred_check_branch
          %411 = sbr.rel (%p409) target = $region52
        $region51: #{tpu_custom_call.1} parent=47 // pred_region
          %412 = dma.done %s405, 256
        $region52: #{tpu_custom_call.1} parent=47 // pred_fallthru
          _
        %s413 = sand.u32 %s34, 1
        %s414 = scalar_lea.sflag [#allocation6], %s413
        %s415 = sand.u32 %s82, 1
        %s416 = smul.addr %s415, 16
        %s417 = scalar_lea.vmem [#allocation5], %s416
        // Predicated region
        $region53: #{tpu_custom_call.1} parent=47 // pred_check
          %p418 = pneg %p95
        $region54: #{tpu_custom_call.1} parent=47 // pred_check_branch
          %420 = sbr.rel (%p418) target = $region56
        $region55: #{tpu_custom_call.1} parent=47 // pred_region
          %421 = dma.done %s414, 256
        $region56: #{tpu_custom_call.1} parent=47 // pred_fallthru
          _
        %s422 = sand.u32 %s34, 1
        %s423 = scalar_lea.sflag [#allocation6], %s422
        %s424 = sand.u32 %s108, 1
        %s425 = smul.addr %s424, 16
        %s426 = scalar_lea.vmem [#allocation7], %s425
        // Predicated region
        $region57: #{tpu_custom_call.1} parent=47 // pred_check
          %p427 = pneg %p121
        $region58: #{tpu_custom_call.1} parent=47 // pred_check_branch
          %429 = sbr.rel (%p427) target = $region60
        $region59: #{tpu_custom_call.1} parent=47 // pred_region
          %430 = dma.done %s423, 256
        $region60: #{tpu_custom_call.1} parent=47 // pred_fallthru
          _
        // Predicated region
        $region61: #{tpu_custom_call.1} parent=47 // pred_check
          %p431 = pneg %p142
        $region62: #{tpu_custom_call.1} parent=47 // pred_check_branch
          %433 = sbr.rel (%p431) target = $region64
        $region63: #{tpu_custom_call.1} parent=47 // pred_region
          %434 = dma.done [#allocation9], 2048
        $region64: #{tpu_custom_call.1} parent=47 // pred_fallthru
          _
        // Predicated region
        $region65: #{tpu_custom_call.1} parent=47 // pred_check
          %p435 = pneg %p163
        $region66: #{tpu_custom_call.1} parent=47 // pred_check_branch
          %437 = sbr.rel (%p435) target = $region68
        $region67: #{tpu_custom_call.1} parent=47 // pred_region
          %438 = dma.done [#allocation9], 2048
        $region68: #{tpu_custom_call.1} parent=47 // pred_fallthru
          _
        // Predicated region
        $region69: #{tpu_custom_call.1} parent=47 // pred_check
          %p439 = pneg %p184
        $region70: #{tpu_custom_call.1} parent=47 // pred_check_branch
          %441 = sbr.rel (%p439) target = $region72
        $region71: #{tpu_custom_call.1} parent=47 // pred_region
          %442 = dma.done [#allocation12], 2048
        $region72: #{tpu_custom_call.1} parent=47 // pred_fallthru
          _
        // Predicated region
        $region73: #{tpu_custom_call.1} parent=47 // pred_check
          %p443 = pneg %p205
        $region74: #{tpu_custom_call.1} parent=47 // pred_check_branch
          %445 = sbr.rel (%p443) target = $region76
        $region75: #{tpu_custom_call.1} parent=47 // pred_region
          %446 = dma.done [#allocation12], 2048
        $region76: #{tpu_custom_call.1} parent=47 // pred_fallthru
          _
        %s447 = sand.u32 %s56, 1
        %s448 = scalar_lea.sflag [#allocation3], %s447
        %s449 = sand.u32 %s56, 1
        %s450 = smul.addr %s449, 16
        %s451 = scalar_lea.vmem [#allocation2], %s450
        %p452 = pneg %p69
        %p453 = pneg %p66
        %s454 = sand.u32 %s34, 1
        %s455 = scalar_lea.sflag [#allocation6], %s454
        %s456 = sand.u32 %s82, 1
        %s457 = smul.addr %s456, 16
        %s458 = scalar_lea.vmem [#allocation5], %s457
        %p459 = pneg %p95
        %p460 = pneg %p92
        %s461 = sand.u32 %s34, 1
        %s462 = scalar_lea.sflag [#allocation6], %s461
        %s463 = sand.u32 %s108, 1
        %s464 = smul.addr %s463, 16
        %s465 = scalar_lea.vmem [#allocation7], %s464
        %p466 = pneg %p121
        %p467 = pneg %p118
        %p468 = pneg %p142
        %p469 = pneg %p139
        %p470 = pneg %p163
        %p471 = pneg %p160
        %p472 = pneg %p184
        %p473 = pneg %p181
        %p474 = pneg %p205
        %p475 = pneg %p202
        %p476 = pneg %p233
        %p477 = pneg %p230
        %s478 = sand.u32 %s220, 1
        %s479 = scalar_lea.sflag [#allocation4], %s478
        %s480 = sand.u32 %s220, 1
        %s481 = smul.addr %s480, 16
        %s482 = scalar_lea.vmem [#allocation14], %s481
        %p483 = pneg %p261
        %p484 = pneg %p258
        %s485 = sand.u32 %s248, 1
        %s486 = scalar_lea.sflag [#allocation16], %s485
        %s487 = sand.u32 %s248, 1
        %s488 = smul.addr %s487, 64
        %s489 = scalar_lea.vmem [#allocation15], %s488
        %s490 = smul.u32 2, %s39
        %s491 = smul.u32 2, %s39
        %s492 = smul.u32 2, %s39
        %v493 = vld [vmem:[%s408] sm:$0xff]
        %v494 = vld [vmem:[%s408 + $0x8] sm:$0xff]
        %v495 = vld [vmem:[%s417] sm:$0xff]
        %v496 = vld [vmem:[%s417 + $0x8] sm:$0xff]
        %v497 = vld [vmem:[%s426] sm:$0xff]
        %v498 = vld [vmem:[%s426 + $0x8] sm:$0xff]
        %v499 = vld [vmem:[#allocation8] sm:$0xff]
        %v500 = vld [vmem:[#allocation8 + $0x8] sm:$0xff]
        %v501 = vld [vmem:[#allocation8 + $0x10] sm:$0xff]
        %v502 = vld [vmem:[#allocation8 + $0x18] sm:$0xff]
        %v503 = vld [vmem:[#allocation8 + $0x20] sm:$0xff]
        %v504 = vld [vmem:[#allocation8 + $0x28] sm:$0xff]
        %v505 = vld [vmem:[#allocation8 + $0x30] sm:$0xff]
        %v506 = vld [vmem:[#allocation8 + $0x38] sm:$0xff]
        %v507 = vld [vmem:[#allocation8 + $0x40] sm:$0xff]
        %v508 = vld [vmem:[#allocation8 + $0x48] sm:$0xff]
        %v509 = vld [vmem:[#allocation8 + $0x50] sm:$0xff]
        %v510 = vld [vmem:[#allocation8 + $0x58] sm:$0xff]
        %v511 = vld [vmem:[#allocation8 + $0x60] sm:$0xff]
        %v512 = vld [vmem:[#allocation8 + $0x68] sm:$0xff]
        %v513 = vld [vmem:[#allocation8 + $0x70] sm:$0xff]
        %v514 = vld [vmem:[#allocation8 + $0x78] sm:$0xff]
        %515 = vmatprep.subr.mxu0 0.0
        %516 = vmatpush1.msra.mxu0 %v514
        %517 = vmatprep.subr.mxu0 0.0
        %518 = vmatpush1.msra.mxu0 %v513
        %519 = vmatprep.subr.mxu0 0.0
        %520 = vmatpush1.msra.mxu0 %v512
        %521 = vmatprep.subr.mxu0 0.0
        %522 = vmatpush1.msra.mxu0 %v511
        %523 = vmatprep.subr.mxu0 0.0
        %524 = vmatpush1.msra.mxu0 %v510
        %525 = vmatprep.subr.mxu0 0.0
        %526 = vmatpush1.msra.mxu0 %v509
        %527 = vmatprep.subr.mxu0 0.0
        %528 = vmatpush1.msra.mxu0 %v508
        %529 = vmatprep.subr.mxu0 0.0
        %530 = vmatpush1.msra.mxu0 %v507
        %531 = vmatprep.subr.mxu0 0.0
        %532 = vmatpush1.msra.mxu0 %v506
        %533 = vmatprep.subr.mxu0 0.0
        %534 = vmatpush1.msra.mxu0 %v505
        %535 = vmatprep.subr.mxu0 0.0
        %536 = vmatpush1.msra.mxu0 %v504
        %537 = vmatprep.subr.mxu0 0.0
        %538 = vmatpush1.msra.mxu0 %v503
        %539 = vmatprep.subr.mxu0 0.0
        %540 = vmatpush1.msra.mxu0 %v502
        %541 = vmatprep.subr.mxu0 0.0
        %542 = vmatpush1.msra.mxu0 %v501
        %543 = vmatprep.subr.mxu0 0.0
        %544 = vmatpush1.msra.mxu0 %v500
        %545 = vmatprep.subr.mxu0 0.0
        %546 = vmatpush1.msra.mxu0 %v499
        %547 = vmatprep.subr.mxu0 0.0
        %548 = vmatpush2.msra.mxu0 0.0
        %549 = vmatprep.subr.mxu0 0.0
        %550 = vmatpush2.msra.mxu0 0.0
        %551 = vmatprep.subr.mxu0 0.0
        %552 = vmatpush2.msra.mxu0 0.0
        %553 = vmatprep.subr.mxu0 0.0
        %554 = vmatpush2.msra.mxu0 0.0
        %555 = vmatprep.subr.mxu0 0.0
        %556 = vmatpush2.msra.mxu0 0.0
        %557 = vmatprep.subr.mxu0 0.0
        %558 = vmatpush2.msra.mxu0 0.0
        %559 = vmatprep.subr.mxu0 0.0
        %560 = vmatpush2.msra.mxu0 0.0
        %561 = vmatprep.subr.mxu0 0.0
        %562 = vmatpush2.msra.mxu0 0.0
        %563 = vmatprep.subr.mxu0 0.0
        %564 = vmatpush2.msra.mxu0 0.0
        %565 = vmatprep.subr.mxu0 0.0
        %566 = vmatpush2.msra.mxu0 0.0
        %567 = vmatprep.subr.mxu0 0.0
        %568 = vmatpush2.msra.mxu0 0.0
        %569 = vmatprep.subr.mxu0 0.0
        %570 = vmatpush2.msra.mxu0 0.0
        %571 = vmatprep.subr.mxu0 0.0
        %572 = vmatpush2.msra.mxu0 0.0
        %573 = vmatprep.subr.mxu0 0.0
        %574 = vmatpush2.msra.mxu0 0.0
        %575 = vmatprep.subr.mxu0 0.0
        %576 = vmatpush2.msra.mxu0 0.0
        %577 = vmatprep.subr.mxu0 0.0
        %578 = vmatpush2.msra.mxu0 0.0
        %579 = vmatprep.mubr.f32.mxu0 0.0
        %580 = vmatmul.mubr.f32.gmra.mxu0 %v493
        %v581 = vpop.f32.mrf.mxu0
        %v582 = vadd.f32 0.0, %v581
        %v583 = vpop.f32.mrf.mxu0
        %584 = vmatprep.mubr.f32.mxu0 0.0
        %585 = vmatmul.mubr.f32.gmra.mxu0 %v494
        %v586 = vpop.f32.mrf.mxu0
        %v587 = vadd.f32 0.0, %v586
        %v588 = vpop.f32.mrf.mxu0
        %589 = vdwg.mxu0
        %v590 = vld [vmem:[#allocation10] sm:$0xff]
        %v591 = vld [vmem:[#allocation10 + $0x8] sm:$0xff]
        %v592 = vld [vmem:[#allocation10 + $0x10] sm:$0xff]
        %v593 = vld [vmem:[#allocation10 + $0x18] sm:$0xff]
        %v594 = vld [vmem:[#allocation10 + $0x20] sm:$0xff]
        %v595 = vld [vmem:[#allocation10 + $0x28] sm:$0xff]
        %v596 = vld [vmem:[#allocation10 + $0x30] sm:$0xff]
        %v597 = vld [vmem:[#allocation10 + $0x38] sm:$0xff]
        %v598 = vld [vmem:[#allocation10 + $0x40] sm:$0xff]
        %v599 = vld [vmem:[#allocation10 + $0x48] sm:$0xff]
        %v600 = vld [vmem:[#allocation10 + $0x50] sm:$0xff]
        %v601 = vld [vmem:[#allocation10 + $0x58] sm:$0xff]
        %v602 = vld [vmem:[#allocation10 + $0x60] sm:$0xff]
        %v603 = vld [vmem:[#allocation10 + $0x68] sm:$0xff]
        %v604 = vld [vmem:[#allocation10 + $0x70] sm:$0xff]
        %v605 = vld [vmem:[#allocation10 + $0x78] sm:$0xff]
        %606 = vmatprep.subr.mxu0 0.0
        %607 = vmatpush1.msra.mxu0 %v605
        %608 = vmatprep.subr.mxu0 0.0
        %609 = vmatpush1.msra.mxu0 %v604
        %610 = vmatprep.subr.mxu0 0.0
        %611 = vmatpush1.msra.mxu0 %v603
        %612 = vmatprep.subr.mxu0 0.0
        %613 = vmatpush1.msra.mxu0 %v602
        %614 = vmatprep.subr.mxu0 0.0
        %615 = vmatpush1.msra.mxu0 %v601
        %616 = vmatprep.subr.mxu0 0.0
        %617 = vmatpush1.msra.mxu0 %v600
        %618 = vmatprep.subr.mxu0 0.0
        %619 = vmatpush1.msra.mxu0 %v599
        %620 = vmatprep.subr.mxu0 0.0
        %621 = vmatpush1.msra.mxu0 %v598
        %622 = vmatprep.subr.mxu0 0.0
        %623 = vmatpush1.msra.mxu0 %v597
        %624 = vmatprep.subr.mxu0 0.0
        %625 = vmatpush1.msra.mxu0 %v596
        %626 = vmatprep.subr.mxu0 0.0
        %627 = vmatpush1.msra.mxu0 %v595
        %628 = vmatprep.subr.mxu0 0.0
        %629 = vmatpush1.msra.mxu0 %v594
        %630 = vmatprep.subr.mxu0 0.0
        %631 = vmatpush1.msra.mxu0 %v593
        %632 = vmatprep.subr.mxu0 0.0
        %633 = vmatpush1.msra.mxu0 %v592
        %634 = vmatprep.subr.mxu0 0.0
        %635 = vmatpush1.msra.mxu0 %v591
        %636 = vmatprep.subr.mxu0 0.0
        %637 = vmatpush1.msra.mxu0 %v590
        %638 = vmatprep.subr.mxu0 0.0
        %639 = vmatpush2.msra.mxu0 0.0
        %640 = vmatprep.subr.mxu0 0.0
        %641 = vmatpush2.msra.mxu0 0.0
        %642 = vmatprep.subr.mxu0 0.0
        %643 = vmatpush2.msra.mxu0 0.0
        %644 = vmatprep.subr.mxu0 0.0
        %645 = vmatpush2.msra.mxu0 0.0
        %646 = vmatprep.subr.mxu0 0.0
        %647 = vmatpush2.msra.mxu0 0.0
        %648 = vmatprep.subr.mxu0 0.0
        %649 = vmatpush2.msra.mxu0 0.0
        %650 = vmatprep.subr.mxu0 0.0
        %651 = vmatpush2.msra.mxu0 0.0
        %652 = vmatprep.subr.mxu0 0.0
        %653 = vmatpush2.msra.mxu0 0.0
        %654 = vmatprep.subr.mxu0 0.0
        %655 = vmatpush2.msra.mxu0 0.0
        %656 = vmatprep.subr.mxu0 0.0
        %657 = vmatpush2.msra.mxu0 0.0
        %658 = vmatprep.subr.mxu0 0.0
        %659 = vmatpush2.msra.mxu0 0.0
        %660 = vmatprep.subr.mxu0 0.0
        %661 = vmatpush2.msra.mxu0 0.0
        %662 = vmatprep.subr.mxu0 0.0
        %663 = vmatpush2.msra.mxu0 0.0
        %664 = vmatprep.subr.mxu0 0.0
        %665 = vmatpush2.msra.mxu0 0.0
        %666 = vmatprep.subr.mxu0 0.0
        %667 = vmatpush2.msra.mxu0 0.0
        %668 = vmatprep.subr.mxu0 0.0
        %669 = vmatpush2.msra.mxu0 0.0
        %670 = vmatprep.mubr.f32.mxu0 0.0
        %671 = vmatmul.mubr.f32.gmra.mxu0 %v495
        %v672 = vpop.f32.mrf.mxu0
        %v673 = vadd.f32 0.0, %v672
        %v674 = vpop.f32.mrf.mxu0
        %675 = vmatprep.mubr.f32.mxu0 0.0
        %676 = vmatmul.mubr.f32.gmra.mxu0 %v496
        %v677 = vpop.f32.mrf.mxu0
        %v678 = vadd.f32 0.0, %v677
        %v679 = vpop.f32.mrf.mxu0
        %680 = vdwg.mxu0
        %v681 = vld [vmem:[#allocation11] sm:$0xff]
        %v682 = vld [vmem:[#allocation11 + $0x8] sm:$0xff]
        %v683 = vld [vmem:[#allocation11 + $0x10] sm:$0xff]
        %v684 = vld [vmem:[#allocation11 + $0x18] sm:$0xff]
        %v685 = vld [vmem:[#allocation11 + $0x20] sm:$0xff]
        %v686 = vld [vmem:[#allocation11 + $0x28] sm:$0xff]
        %v687 = vld [vmem:[#allocation11 + $0x30] sm:$0xff]
        %v688 = vld [vmem:[#allocation11 + $0x38] sm:$0xff]
        %v689 = vld [vmem:[#allocation11 + $0x40] sm:$0xff]
        %v690 = vld [vmem:[#allocation11 + $0x48] sm:$0xff]
        %v691 = vld [vmem:[#allocation11 + $0x50] sm:$0xff]
        %v692 = vld [vmem:[#allocation11 + $0x58] sm:$0xff]
        %v693 = vld [vmem:[#allocation11 + $0x60] sm:$0xff]
        %v694 = vld [vmem:[#allocation11 + $0x68] sm:$0xff]
        %v695 = vld [vmem:[#allocation11 + $0x70] sm:$0xff]
        %v696 = vld [vmem:[#allocation11 + $0x78] sm:$0xff]
        %697 = vmatprep.subr.mxu0 0.0
        %698 = vmatpush1.msra.mxu0 %v696
        %699 = vmatprep.subr.mxu0 0.0
        %700 = vmatpush1.msra.mxu0 %v695
        %701 = vmatprep.subr.mxu0 0.0
        %702 = vmatpush1.msra.mxu0 %v694
        %703 = vmatprep.subr.mxu0 0.0
        %704 = vmatpush1.msra.mxu0 %v693
        %705 = vmatprep.subr.mxu0 0.0
        %706 = vmatpush1.msra.mxu0 %v692
        %707 = vmatprep.subr.mxu0 0.0
        %708 = vmatpush1.msra.mxu0 %v691
        %709 = vmatprep.subr.mxu0 0.0
        %710 = vmatpush1.msra.mxu0 %v690
        %711 = vmatprep.subr.mxu0 0.0
        %712 = vmatpush1.msra.mxu0 %v689
        %713 = vmatprep.subr.mxu0 0.0
        %714 = vmatpush1.msra.mxu0 %v688
        %715 = vmatprep.subr.mxu0 0.0
        %716 = vmatpush1.msra.mxu0 %v687
        %717 = vmatprep.subr.mxu0 0.0
        %718 = vmatpush1.msra.mxu0 %v686
        %719 = vmatprep.subr.mxu0 0.0
        %720 = vmatpush1.msra.mxu0 %v685
        %721 = vmatprep.subr.mxu0 0.0
        %722 = vmatpush1.msra.mxu0 %v684
        %723 = vmatprep.subr.mxu0 0.0
        %724 = vmatpush1.msra.mxu0 %v683
        %725 = vmatprep.subr.mxu0 0.0
        %726 = vmatpush1.msra.mxu0 %v682
        %727 = vmatprep.subr.mxu0 0.0
        %728 = vmatpush1.msra.mxu0 %v681
        %729 = vmatprep.subr.mxu0 0.0
        %730 = vmatpush2.msra.mxu0 0.0
        %731 = vmatprep.subr.mxu0 0.0
        %732 = vmatpush2.msra.mxu0 0.0
        %733 = vmatprep.subr.mxu0 0.0
        %734 = vmatpush2.msra.mxu0 0.0
        %735 = vmatprep.subr.mxu0 0.0
        %736 = vmatpush2.msra.mxu0 0.0
        %737 = vmatprep.subr.mxu0 0.0
        %738 = vmatpush2.msra.mxu0 0.0
        %739 = vmatprep.subr.mxu0 0.0
        %740 = vmatpush2.msra.mxu0 0.0
        %741 = vmatprep.subr.mxu0 0.0
        %742 = vmatpush2.msra.mxu0 0.0
        %743 = vmatprep.subr.mxu0 0.0
        %744 = vmatpush2.msra.mxu0 0.0
        %745 = vmatprep.subr.mxu0 0.0
        %746 = vmatpush2.msra.mxu0 0.0
        %747 = vmatprep.subr.mxu0 0.0
        %748 = vmatpush2.msra.mxu0 0.0
        %749 = vmatprep.subr.mxu0 0.0
        %750 = vmatpush2.msra.mxu0 0.0
        %751 = vmatprep.subr.mxu0 0.0
        %752 = vmatpush2.msra.mxu0 0.0
        %753 = vmatprep.subr.mxu0 0.0
        %754 = vmatpush2.msra.mxu0 0.0
        %755 = vmatprep.subr.mxu0 0.0
        %756 = vmatpush2.msra.mxu0 0.0
        %757 = vmatprep.subr.mxu0 0.0
        %758 = vmatpush2.msra.mxu0 0.0
        %759 = vmatprep.subr.mxu0 0.0
        %760 = vmatpush2.msra.mxu0 0.0
        %761 = vmatprep.mubr.f32.mxu0 0.0
        %762 = vmatmul.mubr.f32.gmra.mxu0 %v497
        %v763 = vpop.f32.mrf.mxu0
        %v764 = vadd.f32 0.0, %v763
        %v765 = vpop.f32.mrf.mxu0
        %766 = vmatprep.mubr.f32.mxu0 0.0
        %767 = vmatmul.mubr.f32.gmra.mxu0 %v498
        %v768 = vpop.f32.mrf.mxu0
        %v769 = vadd.f32 0.0, %v768
        %v770 = vpop.f32.mrf.mxu0
        %771 = vdwg.mxu0
        %vm772 = vcmask 261120
        %v774 = vsel %vm772, %v582, 0
        %v777 = vsel %vm772, %v587, 0
        %v780 = vsel %vm772, %v673, 0
        %v783 = vsel %vm772, %v678, 0
        %785 = vmatprep.subr.mxu0 0.0
        %786 = vmatpush1.xpose.msra.mxu0 0.0
        %787 = vmatprep.subr.mxu0 0.0
        %788 = vmatpush1.xpose.msra.mxu0 0.0
        %789 = vmatprep.subr.mxu0 0.0
        %790 = vmatpush1.xpose.msra.mxu0 0.0
        %791 = vmatprep.subr.mxu0 0.0
        %792 = vmatpush1.xpose.msra.mxu0 0.0
        %793 = vmatprep.subr.mxu0 0.0
        %794 = vmatpush1.xpose.msra.mxu0 0.0
        %795 = vmatprep.subr.mxu0 0.0
        %796 = vmatpush1.xpose.msra.mxu0 0.0
        %797 = vmatprep.subr.mxu0 0.0
        %798 = vmatpush1.xpose.msra.mxu0 0.0
        %799 = vmatprep.subr.mxu0 0.0
        %800 = vmatpush1.xpose.msra.mxu0 0.0
        %801 = vmatprep.subr.mxu0 0.0
        %802 = vmatpush1.xpose.msra.mxu0 0.0
        %803 = vmatprep.subr.mxu0 0.0
        %804 = vmatpush1.xpose.msra.mxu0 0.0
        %805 = vmatprep.subr.mxu0 0.0
        %806 = vmatpush1.xpose.msra.mxu0 0.0
        %807 = vmatprep.subr.mxu0 0.0
        %808 = vmatpush1.xpose.msra.mxu0 0.0
        %809 = vmatprep.subr.mxu0 0.0
        %810 = vmatpush1.xpose.msra.mxu0 0.0
        %811 = vmatprep.subr.mxu0 0.0
        %812 = vmatpush1.xpose.msra.mxu0 0.0
        %813 = vmatprep.subr.mxu0 0.0
        %814 = vmatpush1.xpose.msra.mxu0 %v783
        %815 = vmatprep.subr.mxu0 0.0
        %816 = vmatpush1.xpose.msra.mxu0 %v780
        %817 = vmatprep.subr.mxu0 0.0
        %818 = vmatpush2.xpose.msra.mxu0 0.0
        %819 = vmatprep.subr.mxu0 0.0
        %820 = vmatpush2.xpose.msra.mxu0 0.0
        %821 = vmatprep.subr.mxu0 0.0
        %822 = vmatpush2.xpose.msra.mxu0 0.0
        %823 = vmatprep.subr.mxu0 0.0
        %824 = vmatpush2.xpose.msra.mxu0 0.0
        %825 = vmatprep.subr.mxu0 0.0
        %826 = vmatpush2.xpose.msra.mxu0 0.0
        %827 = vmatprep.subr.mxu0 0.0
        %828 = vmatpush2.xpose.msra.mxu0 0.0
        %829 = vmatprep.subr.mxu0 0.0
        %830 = vmatpush2.xpose.msra.mxu0 0.0
        %831 = vmatprep.subr.mxu0 0.0
        %832 = vmatpush2.xpose.msra.mxu0 0.0
        %833 = vmatprep.subr.mxu0 0.0
        %834 = vmatpush2.xpose.msra.mxu0 0.0
        %835 = vmatprep.subr.mxu0 0.0
        %836 = vmatpush2.xpose.msra.mxu0 0.0
        %837 = vmatprep.subr.mxu0 0.0
        %838 = vmatpush2.xpose.msra.mxu0 0.0
        %839 = vmatprep.subr.mxu0 0.0
        %840 = vmatpush2.xpose.msra.mxu0 0.0
        %841 = vmatprep.subr.mxu0 0.0
        %842 = vmatpush2.xpose.msra.mxu0 0.0
        %843 = vmatprep.subr.mxu0 0.0
        %844 = vmatpush2.xpose.msra.mxu0 0.0
        %845 = vmatprep.subr.mxu0 0.0
        %846 = vmatpush2.xpose.msra.mxu0 0.0
        %847 = vmatprep.subr.mxu0 0.0
        %848 = vmatpush2.xpose.msra.mxu0 0.0
        %849 = vmatprep.mubr.f32.mxu0 0.0
        %850 = vmatmul.mubr.f32.gmra.mxu0 %v774
        %v851 = vpop.f32.mrf.mxu0
        %v852 = vadd.f32 0.0, %v851
        %v853 = vpop.f32.mrf.mxu0
        %854 = vmatprep.mubr.f32.mxu0 0.0
        %855 = vmatmul.mubr.f32.gmra.mxu0 %v777
        %v856 = vpop.f32.mrf.mxu0
        %v857 = vadd.f32 0.0, %v856
        %v858 = vpop.f32.mrf.mxu0
        %859 = vdwg.mxu0
        %vm860 = vcmask 130048
        %v861 = vsel %vm860, %v852, -inf
        %862 = vmax.xlane.f32.xlu0 %v861
        %v863 = vpop.xlane.xlu0 %862
        %v864 = vsel %vm860, %v857, -inf
        %865 = vmax.xlane.f32.xlu0 %v864
        %v866 = vpop.xlane.xlu0 %865
        %v867 = vsub.f32 %v852, %v863
        %v868 = vsub.f32 %v857, %v866
        %v869 = vmul.f32 %v867, 1.442695
        %v870 = vpow.pop %v869
        %v871 = vmul.f32 %v868, 1.442695
        %v872 = vpow.pop %v871
        %v873 = vsel %vm860, %v870, 0.0
        %874 = vadd.xlane.f32.xlu0 %v873
        %v875 = vpop.xlane.xlu0 %874
        %v876 = vsel %vm860, %v872, 0.0
        %877 = vadd.xlane.f32.xlu0 %v876
        %v878 = vpop.xlane.xlu0 %877
        %v879 = vrcp.pop %v875
        %v880 = vmul.f32 %v870, %v879
        %v881 = vrcp.pop %v878
        %v882 = vmul.f32 %v872, %v881
        %883 = vst.msk [vmem:[%s489] sm:$0xff] %vm860, %v880
        %884 = vst.msk [vmem:[%s489 + $0x8] sm:$0xff] %vm860, %v882
        %v886 = vsel %vm860, %v880, 0
        %v889 = vsel %vm860, %v882, 0
        %891 = vmatprep.subr.mxu0 0.0
        %892 = vmatpush1.msra.mxu0 0.0
        %893 = vmatprep.subr.mxu0 0.0
        %894 = vmatpush1.msra.mxu0 0.0
        %895 = vmatprep.subr.mxu0 0.0
        %896 = vmatpush1.msra.mxu0 0.0
        %897 = vmatprep.subr.mxu0 0.0
        %898 = vmatpush1.msra.mxu0 0.0
        %899 = vmatprep.subr.mxu0 0.0
        %900 = vmatpush1.msra.mxu0 0.0
        %901 = vmatprep.subr.mxu0 0.0
        %902 = vmatpush1.msra.mxu0 0.0
        %903 = vmatprep.subr.mxu0 0.0
        %904 = vmatpush1.msra.mxu0 0.0
        %905 = vmatprep.subr.mxu0 0.0
        %906 = vmatpush1.msra.mxu0 0.0
        %907 = vmatprep.subr.mxu0 0.0
        %908 = vmatpush1.msra.mxu0 0.0
        %909 = vmatprep.subr.mxu0 0.0
        %910 = vmatpush1.msra.mxu0 0.0
        %911 = vmatprep.subr.mxu0 0.0
        %912 = vmatpush1.msra.mxu0 0.0
        %913 = vmatprep.subr.mxu0 0.0
        %914 = vmatpush1.msra.mxu0 0.0
        %915 = vmatprep.subr.mxu0 0.0
        %916 = vmatpush1.msra.mxu0 0.0
        %917 = vmatprep.subr.mxu0 0.0
        %918 = vmatpush1.msra.mxu0 0.0
        %919 = vmatprep.subr.mxu0 0.0
        %920 = vmatpush1.msra.mxu0 %v769
        %921 = vmatprep.subr.mxu0 0.0
        %922 = vmatpush1.msra.mxu0 %v764
        %923 = vmatprep.subr.mxu0 0.0
        %924 = vmatpush2.msra.mxu0 0.0
        %925 = vmatprep.subr.mxu0 0.0
        %926 = vmatpush2.msra.mxu0 0.0
        %927 = vmatprep.subr.mxu0 0.0
        %928 = vmatpush2.msra.mxu0 0.0
        %929 = vmatprep.subr.mxu0 0.0
        %930 = vmatpush2.msra.mxu0 0.0
        %931 = vmatprep.subr.mxu0 0.0
        %932 = vmatpush2.msra.mxu0 0.0
        %933 = vmatprep.subr.mxu0 0.0
        %934 = vmatpush2.msra.mxu0 0.0
        %935 = vmatprep.subr.mxu0 0.0
        %936 = vmatpush2.msra.mxu0 0.0
        %937 = vmatprep.subr.mxu0 0.0
        %938 = vmatpush2.msra.mxu0 0.0
        %939 = vmatprep.subr.mxu0 0.0
        %940 = vmatpush2.msra.mxu0 0.0
        %941 = vmatprep.subr.mxu0 0.0
        %942 = vmatpush2.msra.mxu0 0.0
        %943 = vmatprep.subr.mxu0 0.0
        %944 = vmatpush2.msra.mxu0 0.0
        %945 = vmatprep.subr.mxu0 0.0
        %946 = vmatpush2.msra.mxu0 0.0
        %947 = vmatprep.subr.mxu0 0.0
        %948 = vmatpush2.msra.mxu0 0.0
        %949 = vmatprep.subr.mxu0 0.0
        %950 = vmatpush2.msra.mxu0 0.0
        %951 = vmatprep.subr.mxu0 0.0
        %952 = vmatpush2.msra.mxu0 0.0
        %953 = vmatprep.subr.mxu0 0.0
        %954 = vmatpush2.msra.mxu0 0.0
        %955 = vmatprep.mubr.f32.mxu0 0.0
        %956 = vmatmul.mubr.f32.gmra.mxu0 %v886
        %v957 = vpop.f32.mrf.mxu0
        %v958 = vadd.f32 0.0, %v957
        %v959 = vpop.f32.mrf.mxu0
        %960 = vmatprep.mubr.f32.mxu0 0.0
        %961 = vmatmul.mubr.f32.gmra.mxu0 %v889
        %v962 = vpop.f32.mrf.mxu0
        %v963 = vadd.f32 0.0, %v962
        %v964 = vpop.f32.mrf.mxu0
        %965 = vdwg.mxu0
        %966 = vrot.lane.b32.xlu0 %v582, 96
        %v967 = vpop.permute.xlu0 %966
        %968 = vrot.lane.b32.xlu0 %v587, 96
        %v969 = vpop.permute.xlu0 %968
        %970 = vrot.lane.b32.xlu0 %v673, 96
        %v971 = vpop.permute.xlu0 %970
        %972 = vrot.lane.b32.xlu0 %v678, 96
        %v973 = vpop.permute.xlu0 %972
        %v974 = vsel %vm772, %v967, 0
        %v976 = vsel %vm772, %v969, 0
        %v978 = vsel %vm772, %v971, 0
        %v980 = vsel %vm772, %v973, 0
        %982 = vmatprep.subr.mxu0 0.0
        %983 = vmatpush1.xpose.msra.mxu0 0.0
        %984 = vmatprep.subr.mxu0 0.0
        %985 = vmatpush1.xpose.msra.mxu0 0.0
        %986 = vmatprep.subr.mxu0 0.0
        %987 = vmatpush1.xpose.msra.mxu0 0.0
        %988 = vmatprep.subr.mxu0 0.0
        %989 = vmatpush1.xpose.msra.mxu0 0.0
        %990 = vmatprep.subr.mxu0 0.0
        %991 = vmatpush1.xpose.msra.mxu0 0.0
        %992 = vmatprep.subr.mxu0 0.0
        %993 = vmatpush1.xpose.msra.mxu0 0.0
        %994 = vmatprep.subr.mxu0 0.0
        %995 = vmatpush1.xpose.msra.mxu0 0.0
        %996 = vmatprep.subr.mxu0 0.0
        %997 = vmatpush1.xpose.msra.mxu0 0.0
        %998 = vmatprep.subr.mxu0 0.0
        %999 = vmatpush1.xpose.msra.mxu0 0.0
        %1000 = vmatprep.subr.mxu0 0.0
        %1001 = vmatpush1.xpose.msra.mxu0 0.0
        %1002 = vmatprep.subr.mxu0 0.0
        %1003 = vmatpush1.xpose.msra.mxu0 0.0
        %1004 = vmatprep.subr.mxu0 0.0
        %1005 = vmatpush1.xpose.msra.mxu0 0.0
        %1006 = vmatprep.subr.mxu0 0.0
        %1007 = vmatpush1.xpose.msra.mxu0 0.0
        %1008 = vmatprep.subr.mxu0 0.0
        %1009 = vmatpush1.xpose.msra.mxu0 0.0
        %1010 = vmatprep.subr.mxu0 0.0
        %1011 = vmatpush1.xpose.msra.mxu0 %v980
        %1012 = vmatprep.subr.mxu0 0.0
        %1013 = vmatpush1.xpose.msra.mxu0 %v978
        %1014 = vmatprep.subr.mxu0 0.0
        %1015 = vmatpush2.xpose.msra.mxu0 0.0
        %1016 = vmatprep.subr.mxu0 0.0
        %1017 = vmatpush2.xpose.msra.mxu0 0.0
        %1018 = vmatprep.subr.mxu0 0.0
        %1019 = vmatpush2.xpose.msra.mxu0 0.0
        %1020 = vmatprep.subr.mxu0 0.0
        %1021 = vmatpush2.xpose.msra.mxu0 0.0
        %1022 = vmatprep.subr.mxu0 0.0
        %1023 = vmatpush2.xpose.msra.mxu0 0.0
        %1024 = vmatprep.subr.mxu0 0.0
        %1025 = vmatpush2.xpose.msra.mxu0 0.0
        %1026 = vmatprep.subr.mxu0 0.0
        %1027 = vmatpush2.xpose.msra.mxu0 0.0
        %1028 = vmatprep.subr.mxu0 0.0
        %1029 = vmatpush2.xpose.msra.mxu0 0.0
        %1030 = vmatprep.subr.mxu0 0.0
        %1031 = vmatpush2.xpose.msra.mxu0 0.0
        %1032 = vmatprep.subr.mxu0 0.0
        %1033 = vmatpush2.xpose.msra.mxu0 0.0
        %1034 = vmatprep.subr.mxu0 0.0
        %1035 = vmatpush2.xpose.msra.mxu0 0.0
        %1036 = vmatprep.subr.mxu0 0.0
        %1037 = vmatpush2.xpose.msra.mxu0 0.0
        %1038 = vmatprep.subr.mxu0 0.0
        %1039 = vmatpush2.xpose.msra.mxu0 0.0
        %1040 = vmatprep.subr.mxu0 0.0
        %1041 = vmatpush2.xpose.msra.mxu0 0.0
        %1042 = vmatprep.subr.mxu0 0.0
        %1043 = vmatpush2.xpose.msra.mxu0 0.0
        %1044 = vmatprep.subr.mxu0 0.0
        %1045 = vmatpush2.xpose.msra.mxu0 0.0
        %1046 = vmatprep.mubr.f32.mxu0 0.0
        %1047 = vmatmul.mubr.f32.gmra.mxu0 %v974
        %v1048 = vpop.f32.mrf.mxu0
        %v1049 = vadd.f32 0.0, %v1048
        %v1050 = vpop.f32.mrf.mxu0
        %1051 = vmatprep.mubr.f32.mxu0 0.0
        %1052 = vmatmul.mubr.f32.gmra.mxu0 %v976
        %v1053 = vpop.f32.mrf.mxu0
        %v1054 = vadd.f32 0.0, %v1053
        %v1055 = vpop.f32.mrf.mxu0
        %1056 = vdwg.mxu0
        %v1057 = vsel %vm860, %v1049, -inf
        %1058 = vmax.xlane.f32.xlu0 %v1057
        %v1059 = vpop.xlane.xlu0 %1058
        %v1060 = vsel %vm860, %v1054, -inf
        %1061 = vmax.xlane.f32.xlu0 %v1060
        %v1062 = vpop.xlane.xlu0 %1061
        %v1063 = vsub.f32 %v1049, %v1059
        %v1064 = vsub.f32 %v1054, %v1062
        %v1065 = vmul.f32 %v1063, 1.442695
        %v1066 = vpow.pop %v1065
        %v1067 = vmul.f32 %v1064, 1.442695
        %v1068 = vpow.pop %v1067
        %v1069 = vsel %vm860, %v1066, 0.0
        %1070 = vadd.xlane.f32.xlu0 %v1069
        %v1071 = vpop.xlane.xlu0 %1070
        %v1072 = vsel %vm860, %v1068, 0.0
        %1073 = vadd.xlane.f32.xlu0 %v1072
        %v1074 = vpop.xlane.xlu0 %1073
        %v1075 = vrcp.pop %v1071
        %v1076 = vmul.f32 %v1066, %v1075
        %v1077 = vrcp.pop %v1074
        %v1078 = vmul.f32 %v1068, %v1077
        %s1079 = scalar_lea.vmem %s489, 16 [#allocation15]
        %1080 = vst.msk [vmem:[%s1079] sm:$0xff] %vm860, %v1076
        %1081 = vst.msk [vmem:[%s1079 + $0x8] sm:$0xff] %vm860, %v1078
        %1084 = vrot.lane.b32.xlu0 %v764, 96
        %v1085 = vpop.permute.xlu0 %1084
        %1086 = vrot.lane.b32.xlu0 %v769, 96
        %v1087 = vpop.permute.xlu0 %1086
        %v1091 = vsel %vm860, %v1076, 0
        %v1094 = vsel %vm860, %v1078, 0
        %1096 = vmatprep.subr.mxu0 0.0
        %1097 = vmatpush1.msra.mxu0 0.0
        %1098 = vmatprep.subr.mxu0 0.0
        %1099 = vmatpush1.msra.mxu0 0.0
        %1100 = vmatprep.subr.mxu0 0.0
        %1101 = vmatpush1.msra.mxu0 0.0
        %1102 = vmatprep.subr.mxu0 0.0
        %1103 = vmatpush1.msra.mxu0 0.0
        %1104 = vmatprep.subr.mxu0 0.0
        %1105 = vmatpush1.msra.mxu0 0.0
        %1106 = vmatprep.subr.mxu0 0.0
        %1107 = vmatpush1.msra.mxu0 0.0
        %1108 = vmatprep.subr.mxu0 0.0
        %1109 = vmatpush1.msra.mxu0 0.0
        %1110 = vmatprep.subr.mxu0 0.0
        %1111 = vmatpush1.msra.mxu0 0.0
        %1112 = vmatprep.subr.mxu0 0.0
        %1113 = vmatpush1.msra.mxu0 0.0
        %1114 = vmatprep.subr.mxu0 0.0
        %1115 = vmatpush1.msra.mxu0 0.0
        %1116 = vmatprep.subr.mxu0 0.0
        %1117 = vmatpush1.msra.mxu0 0.0
        %1118 = vmatprep.subr.mxu0 0.0
        %1119 = vmatpush1.msra.mxu0 0.0
        %1120 = vmatprep.subr.mxu0 0.0
        %1121 = vmatpush1.msra.mxu0 0.0
        %1122 = vmatprep.subr.mxu0 0.0
        %1123 = vmatpush1.msra.mxu0 0.0
        %1124 = vmatprep.subr.mxu0 0.0
        %1125 = vmatpush1.msra.mxu0 %v1087
        %1126 = vmatprep.subr.mxu0 0.0
        %1127 = vmatpush1.msra.mxu0 %v1085
        %1128 = vmatprep.subr.mxu0 0.0
        %1129 = vmatpush2.msra.mxu0 0.0
        %1130 = vmatprep.subr.mxu0 0.0
        %1131 = vmatpush2.msra.mxu0 0.0
        %1132 = vmatprep.subr.mxu0 0.0
        %1133 = vmatpush2.msra.mxu0 0.0
        %1134 = vmatprep.subr.mxu0 0.0
        %1135 = vmatpush2.msra.mxu0 0.0
        %1136 = vmatprep.subr.mxu0 0.0
        %1137 = vmatpush2.msra.mxu0 0.0
        %1138 = vmatprep.subr.mxu0 0.0
        %1139 = vmatpush2.msra.mxu0 0.0
        %1140 = vmatprep.subr.mxu0 0.0
        %1141 = vmatpush2.msra.mxu0 0.0
        %1142 = vmatprep.subr.mxu0 0.0
        %1143 = vmatpush2.msra.mxu0 0.0
        %1144 = vmatprep.subr.mxu0 0.0
        %1145 = vmatpush2.msra.mxu0 0.0
        %1146 = vmatprep.subr.mxu0 0.0
        %1147 = vmatpush2.msra.mxu0 0.0
        %1148 = vmatprep.subr.mxu0 0.0
        %1149 = vmatpush2.msra.mxu0 0.0
        %1150 = vmatprep.subr.mxu0 0.0
        %1151 = vmatpush2.msra.mxu0 0.0
        %1152 = vmatprep.subr.mxu0 0.0
        %1153 = vmatpush2.msra.mxu0 0.0
        %1154 = vmatprep.subr.mxu0 0.0
        %1155 = vmatpush2.msra.mxu0 0.0
        %1156 = vmatprep.subr.mxu0 0.0
        %1157 = vmatpush2.msra.mxu0 0.0
        %1158 = vmatprep.subr.mxu0 0.0
        %1159 = vmatpush2.msra.mxu0 0.0
        %1160 = vmatprep.mubr.f32.mxu0 0.0
        %1161 = vmatmul.mubr.f32.gmra.mxu0 %v1091
        %v1162 = vpop.f32.mrf.mxu0
        %v1163 = vadd.f32 0.0, %v1162
        %v1164 = vpop.f32.mrf.mxu0
        %1165 = vmatprep.mubr.f32.mxu0 0.0
        %1166 = vmatmul.mubr.f32.gmra.mxu0 %v1094
        %v1167 = vpop.f32.mrf.mxu0
        %v1168 = vadd.f32 0.0, %v1167
        %v1169 = vpop.f32.mrf.mxu0
        %1170 = vdwg.mxu0
        %1171 = vrot.lane.b32.xlu0 %v582, 64
        %v1172 = vpop.permute.xlu0 %1171
        %1173 = vrot.lane.b32.xlu0 %v587, 64
        %v1174 = vpop.permute.xlu0 %1173
        %1175 = vrot.lane.b32.xlu0 %v673, 64
        %v1176 = vpop.permute.xlu0 %1175
        %1177 = vrot.lane.b32.xlu0 %v678, 64
        %v1178 = vpop.permute.xlu0 %1177
        %v1179 = vsel %vm772, %v1172, 0
        %v1181 = vsel %vm772, %v1174, 0
        %v1183 = vsel %vm772, %v1176, 0
        %v1185 = vsel %vm772, %v1178, 0
        %1187 = vmatprep.subr.mxu0 0.0
        %1188 = vmatpush1.xpose.msra.mxu0 0.0
        %1189 = vmatprep.subr.mxu0 0.0
        %1190 = vmatpush1.xpose.msra.mxu0 0.0
        %1191 = vmatprep.subr.mxu0 0.0
        %1192 = vmatpush1.xpose.msra.mxu0 0.0
        %1193 = vmatprep.subr.mxu0 0.0
        %1194 = vmatpush1.xpose.msra.mxu0 0.0
        %1195 = vmatprep.subr.mxu0 0.0
        %1196 = vmatpush1.xpose.msra.mxu0 0.0
        %1197 = vmatprep.subr.mxu0 0.0
        %1198 = vmatpush1.xpose.msra.mxu0 0.0
        %1199 = vmatprep.subr.mxu0 0.0
        %1200 = vmatpush1.xpose.msra.mxu0 0.0
        %1201 = vmatprep.subr.mxu0 0.0
        %1202 = vmatpush1.xpose.msra.mxu0 0.0
        %1203 = vmatprep.subr.mxu0 0.0
        %1204 = vmatpush1.xpose.msra.mxu0 0.0
        %1205 = vmatprep.subr.mxu0 0.0
        %1206 = vmatpush1.xpose.msra.mxu0 0.0
        %1207 = vmatprep.subr.mxu0 0.0
        %1208 = vmatpush1.xpose.msra.mxu0 0.0
        %1209 = vmatprep.subr.mxu0 0.0
        %1210 = vmatpush1.xpose.msra.mxu0 0.0
        %1211 = vmatprep.subr.mxu0 0.0
        %1212 = vmatpush1.xpose.msra.mxu0 0.0
        %1213 = vmatprep.subr.mxu0 0.0
        %1214 = vmatpush1.xpose.msra.mxu0 0.0
        %1215 = vmatprep.subr.mxu0 0.0
        %1216 = vmatpush1.xpose.msra.mxu0 %v1185
        %1217 = vmatprep.subr.mxu0 0.0
        %1218 = vmatpush1.xpose.msra.mxu0 %v1183
        %1219 = vmatprep.subr.mxu0 0.0
        %1220 = vmatpush2.xpose.msra.mxu0 0.0
        %1221 = vmatprep.subr.mxu0 0.0
        %1222 = vmatpush2.xpose.msra.mxu0 0.0
        %1223 = vmatprep.subr.mxu0 0.0
        %1224 = vmatpush2.xpose.msra.mxu0 0.0
        %1225 = vmatprep.subr.mxu0 0.0
        %1226 = vmatpush2.xpose.msra.mxu0 0.0
        %1227 = vmatprep.subr.mxu0 0.0
        %1228 = vmatpush2.xpose.msra.mxu0 0.0
        %1229 = vmatprep.subr.mxu0 0.0
        %1230 = vmatpush2.xpose.msra.mxu0 0.0
        %1231 = vmatprep.subr.mxu0 0.0
        %1232 = vmatpush2.xpose.msra.mxu0 0.0
        %1233 = vmatprep.subr.mxu0 0.0
        %1234 = vmatpush2.xpose.msra.mxu0 0.0
        %1235 = vmatprep.subr.mxu0 0.0
        %1236 = vmatpush2.xpose.msra.mxu0 0.0
        %1237 = vmatprep.subr.mxu0 0.0
        %1238 = vmatpush2.xpose.msra.mxu0 0.0
        %1239 = vmatprep.subr.mxu0 0.0
        %1240 = vmatpush2.xpose.msra.mxu0 0.0
        %1241 = vmatprep.subr.mxu0 0.0
        %1242 = vmatpush2.xpose.msra.mxu0 0.0
        %1243 = vmatprep.subr.mxu0 0.0
        %1244 = vmatpush2.xpose.msra.mxu0 0.0
        %1245 = vmatprep.subr.mxu0 0.0
        %1246 = vmatpush2.xpose.msra.mxu0 0.0
        %1247 = vmatprep.subr.mxu0 0.0
        %1248 = vmatpush2.xpose.msra.mxu0 0.0
        %1249 = vmatprep.subr.mxu0 0.0
        %1250 = vmatpush2.xpose.msra.mxu0 0.0
        %1251 = vmatprep.mubr.f32.mxu0 0.0
        %1252 = vmatmul.mubr.f32.gmra.mxu0 %v1179
        %v1253 = vpop.f32.mrf.mxu0
        %v1254 = vadd.f32 0.0, %v1253
        %v1255 = vpop.f32.mrf.mxu0
        %1256 = vmatprep.mubr.f32.mxu0 0.0
        %1257 = vmatmul.mubr.f32.gmra.mxu0 %v1181
        %v1258 = vpop.f32.mrf.mxu0
        %v1259 = vadd.f32 0.0, %v1258
        %v1260 = vpop.f32.mrf.mxu0
        %1261 = vdwg.mxu0
        %v1262 = vsel %vm860, %v1254, -inf
        %1263 = vmax.xlane.f32.xlu0 %v1262
        %v1264 = vpop.xlane.xlu0 %1263
        %v1265 = vsel %vm860, %v1259, -inf
        %1266 = vmax.xlane.f32.xlu0 %v1265
        %v1267 = vpop.xlane.xlu0 %1266
        %v1268 = vsub.f32 %v1254, %v1264
        %v1269 = vsub.f32 %v1259, %v1267
        %v1270 = vmul.f32 %v1268, 1.442695
        %v1271 = vpow.pop %v1270
        %v1272 = vmul.f32 %v1269, 1.442695
        %v1273 = vpow.pop %v1272
        %v1274 = vsel %vm860, %v1271, 0.0
        %1275 = vadd.xlane.f32.xlu0 %v1274
        %v1276 = vpop.xlane.xlu0 %1275
        %v1277 = vsel %vm860, %v1273, 0.0
        %1278 = vadd.xlane.f32.xlu0 %v1277
        %v1279 = vpop.xlane.xlu0 %1278
        %v1280 = vrcp.pop %v1276
        %v1281 = vmul.f32 %v1271, %v1280
        %v1282 = vrcp.pop %v1279
        %v1283 = vmul.f32 %v1273, %v1282
        %s1284 = scalar_lea.vmem %s489, 32 [#allocation15]
        %1285 = vst.msk [vmem:[%s1284] sm:$0xff] %vm860, %v1281
        %1286 = vst.msk [vmem:[%s1284 + $0x8] sm:$0xff] %vm860, %v1283
        %1287 = vrot.lane.b32.xlu0 %v764, 64
        %v1288 = vpop.permute.xlu0 %1287
        %1289 = vrot.lane.b32.xlu0 %v769, 64
        %v1290 = vpop.permute.xlu0 %1289
        %v1294 = vsel %vm860, %v1281, 0
        %v1297 = vsel %vm860, %v1283, 0
        %1299 = vmatprep.subr.mxu0 0.0
        %1300 = vmatpush1.msra.mxu0 0.0
        %1301 = vmatprep.subr.mxu0 0.0
        %1302 = vmatpush1.msra.mxu0 0.0
        %1303 = vmatprep.subr.mxu0 0.0
        %1304 = vmatpush1.msra.mxu0 0.0
        %1305 = vmatprep.subr.mxu0 0.0
        %1306 = vmatpush1.msra.mxu0 0.0
        %1307 = vmatprep.subr.mxu0 0.0
        %1308 = vmatpush1.msra.mxu0 0.0
        %1309 = vmatprep.subr.mxu0 0.0
        %1310 = vmatpush1.msra.mxu0 0.0
        %1311 = vmatprep.subr.mxu0 0.0
        %1312 = vmatpush1.msra.mxu0 0.0
        %1313 = vmatprep.subr.mxu0 0.0
        %1314 = vmatpush1.msra.mxu0 0.0
        %1315 = vmatprep.subr.mxu0 0.0
        %1316 = vmatpush1.msra.mxu0 0.0
        %1317 = vmatprep.subr.mxu0 0.0
        %1318 = vmatpush1.msra.mxu0 0.0
        %1319 = vmatprep.subr.mxu0 0.0
        %1320 = vmatpush1.msra.mxu0 0.0
        %1321 = vmatprep.subr.mxu0 0.0
        %1322 = vmatpush1.msra.mxu0 0.0
        %1323 = vmatprep.subr.mxu0 0.0
        %1324 = vmatpush1.msra.mxu0 0.0
        %1325 = vmatprep.subr.mxu0 0.0
        %1326 = vmatpush1.msra.mxu0 0.0
        %1327 = vmatprep.subr.mxu0 0.0
        %1328 = vmatpush1.msra.mxu0 %v1290
        %1329 = vmatprep.subr.mxu0 0.0
        %1330 = vmatpush1.msra.mxu0 %v1288
        %1331 = vmatprep.subr.mxu0 0.0
        %1332 = vmatpush2.msra.mxu0 0.0
        %1333 = vmatprep.subr.mxu0 0.0
        %1334 = vmatpush2.msra.mxu0 0.0
        %1335 = vmatprep.subr.mxu0 0.0
        %1336 = vmatpush2.msra.mxu0 0.0
        %1337 = vmatprep.subr.mxu0 0.0
        %1338 = vmatpush2.msra.mxu0 0.0
        %1339 = vmatprep.subr.mxu0 0.0
        %1340 = vmatpush2.msra.mxu0 0.0
        %1341 = vmatprep.subr.mxu0 0.0
        %1342 = vmatpush2.msra.mxu0 0.0
        %1343 = vmatprep.subr.mxu0 0.0
        %1344 = vmatpush2.msra.mxu0 0.0
        %1345 = vmatprep.subr.mxu0 0.0
        %1346 = vmatpush2.msra.mxu0 0.0
        %1347 = vmatprep.subr.mxu0 0.0
        %1348 = vmatpush2.msra.mxu0 0.0
        %1349 = vmatprep.subr.mxu0 0.0
        %1350 = vmatpush2.msra.mxu0 0.0
        %1351 = vmatprep.subr.mxu0 0.0
        %1352 = vmatpush2.msra.mxu0 0.0
        %1353 = vmatprep.subr.mxu0 0.0
        %1354 = vmatpush2.msra.mxu0 0.0
        %1355 = vmatprep.subr.mxu0 0.0
        %1356 = vmatpush2.msra.mxu0 0.0
        %1357 = vmatprep.subr.mxu0 0.0
        %1358 = vmatpush2.msra.mxu0 0.0
        %1359 = vmatprep.subr.mxu0 0.0
        %1360 = vmatpush2.msra.mxu0 0.0
        %1361 = vmatprep.subr.mxu0 0.0
        %1362 = vmatpush2.msra.mxu0 0.0
        %1363 = vmatprep.mubr.f32.mxu0 0.0
        %1364 = vmatmul.mubr.f32.gmra.mxu0 %v1294
        %v1365 = vpop.f32.mrf.mxu0
        %v1366 = vadd.f32 0.0, %v1365
        %v1367 = vpop.f32.mrf.mxu0
        %1368 = vmatprep.mubr.f32.mxu0 0.0
        %1369 = vmatmul.mubr.f32.gmra.mxu0 %v1297
        %v1370 = vpop.f32.mrf.mxu0
        %v1371 = vadd.f32 0.0, %v1370
        %v1372 = vpop.f32.mrf.mxu0
        %1373 = vdwg.mxu0
        %1374 = vrot.lane.b32.xlu0 %v582, 32
        %v1375 = vpop.permute.xlu0 %1374
        %1376 = vrot.lane.b32.xlu0 %v587, 32
        %v1377 = vpop.permute.xlu0 %1376
        %1378 = vrot.lane.b32.xlu0 %v673, 32
        %v1379 = vpop.permute.xlu0 %1378
        %1380 = vrot.lane.b32.xlu0 %v678, 32
        %v1381 = vpop.permute.xlu0 %1380
        %v1382 = vsel %vm772, %v1375, 0
        %v1384 = vsel %vm772, %v1377, 0
        %v1386 = vsel %vm772, %v1379, 0
        %v1388 = vsel %vm772, %v1381, 0
        %1390 = vmatprep.subr.mxu0 0.0
        %1391 = vmatpush1.xpose.msra.mxu0 0.0
        %1392 = vmatprep.subr.mxu0 0.0
        %1393 = vmatpush1.xpose.msra.mxu0 0.0
        %1394 = vmatprep.subr.mxu0 0.0
        %1395 = vmatpush1.xpose.msra.mxu0 0.0
        %1396 = vmatprep.subr.mxu0 0.0
        %1397 = vmatpush1.xpose.msra.mxu0 0.0
        %1398 = vmatprep.subr.mxu0 0.0
        %1399 = vmatpush1.xpose.msra.mxu0 0.0
        %1400 = vmatprep.subr.mxu0 0.0
        %1401 = vmatpush1.xpose.msra.mxu0 0.0
        %1402 = vmatprep.subr.mxu0 0.0
        %1403 = vmatpush1.xpose.msra.mxu0 0.0
        %1404 = vmatprep.subr.mxu0 0.0
        %1405 = vmatpush1.xpose.msra.mxu0 0.0
        %1406 = vmatprep.subr.mxu0 0.0
        %1407 = vmatpush1.xpose.msra.mxu0 0.0
        %1408 = vmatprep.subr.mxu0 0.0
        %1409 = vmatpush1.xpose.msra.mxu0 0.0
        %1410 = vmatprep.subr.mxu0 0.0
        %1411 = vmatpush1.xpose.msra.mxu0 0.0
        %1412 = vmatprep.subr.mxu0 0.0
        %1413 = vmatpush1.xpose.msra.mxu0 0.0
        %1414 = vmatprep.subr.mxu0 0.0
        %1415 = vmatpush1.xpose.msra.mxu0 0.0
        %1416 = vmatprep.subr.mxu0 0.0
        %1417 = vmatpush1.xpose.msra.mxu0 0.0
        %1418 = vmatprep.subr.mxu0 0.0
        %1419 = vmatpush1.xpose.msra.mxu0 %v1388
        %1420 = vmatprep.subr.mxu0 0.0
        %1421 = vmatpush1.xpose.msra.mxu0 %v1386
        %1422 = vmatprep.subr.mxu0 0.0
        %1423 = vmatpush2.xpose.msra.mxu0 0.0
        %1424 = vmatprep.subr.mxu0 0.0
        %1425 = vmatpush2.xpose.msra.mxu0 0.0
        %1426 = vmatprep.subr.mxu0 0.0
        %1427 = vmatpush2.xpose.msra.mxu0 0.0
        %1428 = vmatprep.subr.mxu0 0.0
        %1429 = vmatpush2.xpose.msra.mxu0 0.0
        %1430 = vmatprep.subr.mxu0 0.0
        %1431 = vmatpush2.xpose.msra.mxu0 0.0
        %1432 = vmatprep.subr.mxu0 0.0
        %1433 = vmatpush2.xpose.msra.mxu0 0.0
        %1434 = vmatprep.subr.mxu0 0.0
        %1435 = vmatpush2.xpose.msra.mxu0 0.0
        %1436 = vmatprep.subr.mxu0 0.0
        %1437 = vmatpush2.xpose.msra.mxu0 0.0
        %1438 = vmatprep.subr.mxu0 0.0
        %1439 = vmatpush2.xpose.msra.mxu0 0.0
        %1440 = vmatprep.subr.mxu0 0.0
        %1441 = vmatpush2.xpose.msra.mxu0 0.0
        %1442 = vmatprep.subr.mxu0 0.0
        %1443 = vmatpush2.xpose.msra.mxu0 0.0
        %1444 = vmatprep.subr.mxu0 0.0
        %1445 = vmatpush2.xpose.msra.mxu0 0.0
        %1446 = vmatprep.subr.mxu0 0.0
        %1447 = vmatpush2.xpose.msra.mxu0 0.0
        %1448 = vmatprep.subr.mxu0 0.0
        %1449 = vmatpush2.xpose.msra.mxu0 0.0
        %1450 = vmatprep.subr.mxu0 0.0
        %1451 = vmatpush2.xpose.msra.mxu0 0.0
        %1452 = vmatprep.subr.mxu0 0.0
        %1453 = vmatpush2.xpose.msra.mxu0 0.0
        %1454 = vmatprep.mubr.f32.mxu0 0.0
        %1455 = vmatmul.mubr.f32.gmra.mxu0 %v1382
        %v1456 = vpop.f32.mrf.mxu0
        %v1457 = vadd.f32 0.0, %v1456
        %v1458 = vpop.f32.mrf.mxu0
        %1459 = vmatprep.mubr.f32.mxu0 0.0
        %1460 = vmatmul.mubr.f32.gmra.mxu0 %v1384
        %v1461 = vpop.f32.mrf.mxu0
        %v1462 = vadd.f32 0.0, %v1461
        %v1463 = vpop.f32.mrf.mxu0
        %1464 = vdwg.mxu0
        %v1465 = vsel %vm860, %v1457, -inf
        %1466 = vmax.xlane.f32.xlu0 %v1465
        %v1467 = vpop.xlane.xlu0 %1466
        %v1468 = vsel %vm860, %v1462, -inf
        %1469 = vmax.xlane.f32.xlu0 %v1468
        %v1470 = vpop.xlane.xlu0 %1469
        %v1471 = vsub.f32 %v1457, %v1467
        %v1472 = vsub.f32 %v1462, %v1470
        %v1473 = vmul.f32 %v1471, 1.442695
        %v1474 = vpow.pop %v1473
        %v1475 = vmul.f32 %v1472, 1.442695
        %v1476 = vpow.pop %v1475
        %v1477 = vsel %vm860, %v1474, 0.0
        %1478 = vadd.xlane.f32.xlu0 %v1477
        %v1479 = vpop.xlane.xlu0 %1478
        %v1480 = vsel %vm860, %v1476, 0.0
        %1481 = vadd.xlane.f32.xlu0 %v1480
        %v1482 = vpop.xlane.xlu0 %1481
        %v1483 = vrcp.pop %v1479
        %v1484 = vmul.f32 %v1474, %v1483
        %v1485 = vrcp.pop %v1482
        %v1486 = vmul.f32 %v1476, %v1485
        %s1487 = scalar_lea.vmem %s489, 48 [#allocation15]
        %1488 = vst.msk [vmem:[%s1487] sm:$0xff] %vm860, %v1484
        %1489 = vst.msk [vmem:[%s1487 + $0x8] sm:$0xff] %vm860, %v1486
        %1490 = vrot.lane.b32.xlu0 %v764, 32
        %v1491 = vpop.permute.xlu0 %1490
        %1492 = vrot.lane.b32.xlu0 %v769, 32
        %v1493 = vpop.permute.xlu0 %1492
        %v1497 = vsel %vm860, %v1484, 0
        %v1500 = vsel %vm860, %v1486, 0
        %1502 = vmatprep.subr.mxu0 0.0
        %1503 = vmatpush1.msra.mxu0 0.0
        %1504 = vmatprep.subr.mxu0 0.0
        %1505 = vmatpush1.msra.mxu0 0.0
        %1506 = vmatprep.subr.mxu0 0.0
        %1507 = vmatpush1.msra.mxu0 0.0
        %1508 = vmatprep.subr.mxu0 0.0
        %1509 = vmatpush1.msra.mxu0 0.0
        %1510 = vmatprep.subr.mxu0 0.0
        %1511 = vmatpush1.msra.mxu0 0.0
        %1512 = vmatprep.subr.mxu0 0.0
        %1513 = vmatpush1.msra.mxu0 0.0
        %1514 = vmatprep.subr.mxu0 0.0
        %1515 = vmatpush1.msra.mxu0 0.0
        %1516 = vmatprep.subr.mxu0 0.0
        %1517 = vmatpush1.msra.mxu0 0.0
        %1518 = vmatprep.subr.mxu0 0.0
        %1519 = vmatpush1.msra.mxu0 0.0
        %1520 = vmatprep.subr.mxu0 0.0
        %1521 = vmatpush1.msra.mxu0 0.0
        %1522 = vmatprep.subr.mxu0 0.0
        %1523 = vmatpush1.msra.mxu0 0.0
        %1524 = vmatprep.subr.mxu0 0.0
        %1525 = vmatpush1.msra.mxu0 0.0
        %1526 = vmatprep.subr.mxu0 0.0
        %1527 = vmatpush1.msra.mxu0 0.0
        %1528 = vmatprep.subr.mxu0 0.0
        %1529 = vmatpush1.msra.mxu0 0.0
        %1530 = vmatprep.subr.mxu0 0.0
        %1531 = vmatpush1.msra.mxu0 %v1493
        %1532 = vmatprep.subr.mxu0 0.0
        %1533 = vmatpush1.msra.mxu0 %v1491
        %1534 = vmatprep.subr.mxu0 0.0
        %1535 = vmatpush2.msra.mxu0 0.0
        %1536 = vmatprep.subr.mxu0 0.0
        %1537 = vmatpush2.msra.mxu0 0.0
        %1538 = vmatprep.subr.mxu0 0.0
        %1539 = vmatpush2.msra.mxu0 0.0
        %1540 = vmatprep.subr.mxu0 0.0
        %1541 = vmatpush2.msra.mxu0 0.0
        %1542 = vmatprep.subr.mxu0 0.0
        %1543 = vmatpush2.msra.mxu0 0.0
        %1544 = vmatprep.subr.mxu0 0.0
        %1545 = vmatpush2.msra.mxu0 0.0
        %1546 = vmatprep.subr.mxu0 0.0
        %1547 = vmatpush2.msra.mxu0 0.0
        %1548 = vmatprep.subr.mxu0 0.0
        %1549 = vmatpush2.msra.mxu0 0.0
        %1550 = vmatprep.subr.mxu0 0.0
        %1551 = vmatpush2.msra.mxu0 0.0
        %1552 = vmatprep.subr.mxu0 0.0
        %1553 = vmatpush2.msra.mxu0 0.0
        %1554 = vmatprep.subr.mxu0 0.0
        %1555 = vmatpush2.msra.mxu0 0.0
        %1556 = vmatprep.subr.mxu0 0.0
        %1557 = vmatpush2.msra.mxu0 0.0
        %1558 = vmatprep.subr.mxu0 0.0
        %1559 = vmatpush2.msra.mxu0 0.0
        %1560 = vmatprep.subr.mxu0 0.0
        %1561 = vmatpush2.msra.mxu0 0.0
        %1562 = vmatprep.subr.mxu0 0.0
        %1563 = vmatpush2.msra.mxu0 0.0
        %1564 = vmatprep.subr.mxu0 0.0
        %1565 = vmatpush2.msra.mxu0 0.0
        %1566 = vmatprep.mubr.f32.mxu0 0.0
        %1567 = vmatmul.mubr.f32.gmra.mxu0 %v1497
        %v1568 = vpop.f32.mrf.mxu0
        %v1569 = vadd.f32 0.0, %v1568
        %v1570 = vpop.f32.mrf.mxu0
        %1571 = vmatprep.mubr.f32.mxu0 0.0
        %1572 = vmatmul.mubr.f32.gmra.mxu0 %v1500
        %v1573 = vpop.f32.mrf.mxu0
        %v1574 = vadd.f32 0.0, %v1573
        %v1575 = vpop.f32.mrf.mxu0
        %1576 = vdwg.mxu0
        %1579 = vrot.lane.b32.xlu0 %v1163, 32
        %v1580 = vpop.permute.xlu0 %1579
        %1581 = vrot.lane.b32.xlu0 %v1168, 32
        %v1582 = vpop.permute.xlu0 %1581
        %1587 = vrot.lane.b32.xlu0 %v1366, 64
        %v1588 = vpop.permute.xlu0 %1587
        %1589 = vrot.lane.b32.xlu0 %v1371, 64
        %v1590 = vpop.permute.xlu0 %1589
        %1595 = vrot.lane.b32.xlu0 %v1569, 96
        %v1596 = vpop.permute.xlu0 %1595
        %1597 = vrot.lane.b32.xlu0 %v1574, 96
        %v1598 = vpop.permute.xlu0 %1597
        %v1601 = vsel %vm772, %v958, %v1580
        %v1602 = vsel %vm772, %v963, %v1582
        %vm1603 = vcmask 523264
        %v1604 = vsel %vm1603, %v1601, %v1588
        %v1605 = vsel %vm1603, %v1602, %v1590
        %vm1606 = vcmask 785408
        %v1607 = vsel %vm1606, %v1604, %v1596
        %v1608 = vsel %vm1606, %v1605, %v1598
        %v1609 = vld [vmem:[#allocation13] sm:$0xff]
        %v1610 = vld [vmem:[#allocation13 + $0x8] sm:$0xff]
        %v1611 = vld [vmem:[#allocation13 + $0x10] sm:$0xff]
        %v1612 = vld [vmem:[#allocation13 + $0x18] sm:$0xff]
        %v1613 = vld [vmem:[#allocation13 + $0x20] sm:$0xff]
        %v1614 = vld [vmem:[#allocation13 + $0x28] sm:$0xff]
        %v1615 = vld [vmem:[#allocation13 + $0x30] sm:$0xff]
        %v1616 = vld [vmem:[#allocation13 + $0x38] sm:$0xff]
        %v1617 = vld [vmem:[#allocation13 + $0x40] sm:$0xff]
        %v1618 = vld [vmem:[#allocation13 + $0x48] sm:$0xff]
        %v1619 = vld [vmem:[#allocation13 + $0x50] sm:$0xff]
        %v1620 = vld [vmem:[#allocation13 + $0x58] sm:$0xff]
        %v1621 = vld [vmem:[#allocation13 + $0x60] sm:$0xff]
        %v1622 = vld [vmem:[#allocation13 + $0x68] sm:$0xff]
        %v1623 = vld [vmem:[#allocation13 + $0x70] sm:$0xff]
        %v1624 = vld [vmem:[#allocation13 + $0x78] sm:$0xff]
        %1625 = vmatprep.subr.mxu0 0.0
        %1626 = vmatpush1.msra.mxu0 %v1624
        %1627 = vmatprep.subr.mxu0 0.0
        %1628 = vmatpush1.msra.mxu0 %v1623
        %1629 = vmatprep.subr.mxu0 0.0
        %1630 = vmatpush1.msra.mxu0 %v1622
        %1631 = vmatprep.subr.mxu0 0.0
        %1632 = vmatpush1.msra.mxu0 %v1621
        %1633 = vmatprep.subr.mxu0 0.0
        %1634 = vmatpush1.msra.mxu0 %v1620
        %1635 = vmatprep.subr.mxu0 0.0
        %1636 = vmatpush1.msra.mxu0 %v1619
        %1637 = vmatprep.subr.mxu0 0.0
        %1638 = vmatpush1.msra.mxu0 %v1618
        %1639 = vmatprep.subr.mxu0 0.0
        %1640 = vmatpush1.msra.mxu0 %v1617
        %1641 = vmatprep.subr.mxu0 0.0
        %1642 = vmatpush1.msra.mxu0 %v1616
        %1643 = vmatprep.subr.mxu0 0.0
        %1644 = vmatpush1.msra.mxu0 %v1615
        %1645 = vmatprep.subr.mxu0 0.0
        %1646 = vmatpush1.msra.mxu0 %v1614
        %1647 = vmatprep.subr.mxu0 0.0
        %1648 = vmatpush1.msra.mxu0 %v1613
        %1649 = vmatprep.subr.mxu0 0.0
        %1650 = vmatpush1.msra.mxu0 %v1612
        %1651 = vmatprep.subr.mxu0 0.0
        %1652 = vmatpush1.msra.mxu0 %v1611
        %1653 = vmatprep.subr.mxu0 0.0
        %1654 = vmatpush1.msra.mxu0 %v1610
        %1655 = vmatprep.subr.mxu0 0.0
        %1656 = vmatpush1.msra.mxu0 %v1609
        %1657 = vmatprep.subr.mxu0 0.0
        %1658 = vmatpush2.msra.mxu0 0.0
        %1659 = vmatprep.subr.mxu0 0.0
        %1660 = vmatpush2.msra.mxu0 0.0
        %1661 = vmatprep.subr.mxu0 0.0
        %1662 = vmatpush2.msra.mxu0 0.0
        %1663 = vmatprep.subr.mxu0 0.0
        %1664 = vmatpush2.msra.mxu0 0.0
        %1665 = vmatprep.subr.mxu0 0.0
        %1666 = vmatpush2.msra.mxu0 0.0
        %1667 = vmatprep.subr.mxu0 0.0
        %1668 = vmatpush2.msra.mxu0 0.0
        %1669 = vmatprep.subr.mxu0 0.0
        %1670 = vmatpush2.msra.mxu0 0.0
        %1671 = vmatprep.subr.mxu0 0.0
        %1672 = vmatpush2.msra.mxu0 0.0
        %1673 = vmatprep.subr.mxu0 0.0
        %1674 = vmatpush2.msra.mxu0 0.0
        %1675 = vmatprep.subr.mxu0 0.0
        %1676 = vmatpush2.msra.mxu0 0.0
        %1677 = vmatprep.subr.mxu0 0.0
        %1678 = vmatpush2.msra.mxu0 0.0
        %1679 = vmatprep.subr.mxu0 0.0
        %1680 = vmatpush2.msra.mxu0 0.0
        %1681 = vmatprep.subr.mxu0 0.0
        %1682 = vmatpush2.msra.mxu0 0.0
        %1683 = vmatprep.subr.mxu0 0.0
        %1684 = vmatpush2.msra.mxu0 0.0
        %1685 = vmatprep.subr.mxu0 0.0
        %1686 = vmatpush2.msra.mxu0 0.0
        %1687 = vmatprep.subr.mxu0 0.0
        %1688 = vmatpush2.msra.mxu0 0.0
        %1689 = vmatprep.mubr.f32.mxu0 0.0
        %1690 = vmatmul.mubr.f32.gmra.mxu0 %v1607
        %v1691 = vpop.f32.mrf.mxu0
        %v1692 = vadd.f32 %v493, %v1691
        %v1693 = vpop.f32.mrf.mxu0
        %1694 = vmatprep.mubr.f32.mxu0 0.0
        %1695 = vmatmul.mubr.f32.gmra.mxu0 %v1608
        %v1696 = vpop.f32.mrf.mxu0
        %v1697 = vadd.f32 %v494, %v1696
        %v1698 = vpop.f32.mrf.mxu0
        %1699 = vdwg.mxu0
        %1700 = vadd.xlane.f32.xlu0 %v1692
        %v1701 = vpop.xlane.xlu0 %1700
        %1702 = vadd.xlane.f32.xlu0 %v1697
        %v1703 = vpop.xlane.xlu0 %1702
        %v1704 = vrcp.pop 128.0
        %v1705 = vmul.f32 %v1701, %v1704
        %v1706 = vmul.f32 %v1703, %v1704
        %v1707 = vsub.f32 %v1692, %v1705
        %v1708 = vsub.f32 %v1697, %v1706
        %v1709 = vmul.f32 %v1707, %v1707
        %v1710 = vmul.f32 %v1708, %v1708
        %1711 = vadd.xlane.f32.xlu0 %v1709
        %v1712 = vpop.xlane.xlu0 %1711
        %1713 = vadd.xlane.f32.xlu0 %v1710
        %v1714 = vpop.xlane.xlu0 %1713
        %v1715 = vmul.f32 %v1712, %v1704
        %v1716 = vmul.f32 %v1714, %v1704
        %v1717 = vadd.f32 %v1715, 1e-05
        %v1718 = vadd.f32 %v1716, 1e-05
        %v1719 = vrsqrt.pop %v1717
        %v1720 = vrsqrt.pop %v1718
        %v1721 = vmul.f32 %v1707, %v1719
        %v1722 = vmul.f32 %v1708, %v1720
        %1723 = vst [vmem:[%s482] sm:$0xff] %v1721
        %1724 = vst [vmem:[%s482 + $0x8] sm:$0xff] %v1722
        %s1725 = sand.u32 %s220, 1
        %s1726 = scalar_lea.sflag [#allocation4], %s1725
        %s1727 = sand.u32 %s220, 1
        %s1728 = smul.addr %s1727, 16
        %s1729 = scalar_lea.vmem [#allocation14], %s1728
        %s1730 = sand.u32 %s248, 1
        %s1731 = scalar_lea.sflag [#allocation16], %s1730
        %s1732 = sand.u32 %s248, 1
        %s1733 = smul.addr %s1732, 64
        %s1734 = scalar_lea.vmem [#allocation15], %s1733
        // Predicated region
        $region77: #{tpu_custom_call.1} parent=47 // pred_check
          %p1735 = pneg %p230
        $region78: #{tpu_custom_call.1} parent=47 // pred_check_branch
          %1737 = sbr.rel (%p1735) target = $region80
        $region79: #{tpu_custom_call.1} parent=47 // pred_region
          %s1738 = smul.u32 2, %s39
          %s1740 = ssub.s32 256, 256
          %1741 = vsyncadd %s1726, %s1740
          %s1742 = smul.addr %s38, 2
          %s1743 = sadd.s32 %s1738, %s1742
          %s1744 = smul.addr %s1743, 128
          %s1745 = scalar_lea.hbm %s7, %s1744
          %s1746 = sshll.u32 %s1729, 4
          %s1747 = int_to_ptr.vmem [resolvable:$true] %s1746
          %1752 = dma.vmem_to_hbm [thread:$0]  %s1747, 256, %s1745, %s1726, 128, 128, 8
        $region80: #{tpu_custom_call.1} parent=47 // pred_fallthru
          _
        // Predicated region
        $region81: #{tpu_custom_call.1} parent=47 // pred_check
          %p1753 = pneg %p258
        $region82: #{tpu_custom_call.1} parent=47 // pred_check_branch
          %1755 = sbr.rel (%p1753) target = $region84
        $region83: #{tpu_custom_call.1} parent=47 // pred_region
          %s1756 = smul.u32 2, %s39
          %s1758 = ssub.s32 1024, 1024
          %1759 = vsyncadd %s1731, %s1758
          %s1760 = smul.addr %s38, 8
          %s1761 = sadd.s32 %s1756, %s1760
          %s1762 = smul.addr %s1761, 128
          %s1763 = scalar_lea.hbm %s8, %s1762
          %s1764 = sshll.u32 %s1734, 4
          %s1765 = int_to_ptr.vmem [resolvable:$true] %s1764
          %1770 = dma.vmem_to_hbm [thread:$0]  %s1765, 1024, %s1763, %s1731, 128, 128, 8
        $region84: #{tpu_custom_call.1} parent=47 // pred_fallthru
          _
      $region48: #{tpu_custom_call.1} parent=5 // pred_fallthru
        _
      %p1771 = scmp.le.s32.totalorder 2, %s29
      // Predicated region
      $region85: #{tpu_custom_call.1} parent=5 // pred_check
        %p1772 = pneg %p1771
      $region86: #{tpu_custom_call.1} parent=5 // pred_check_branch
        %1774 = sbr.rel (%p1772) target = $region88
      $region87: #{tpu_custom_call.1} parent=5 // pred_region
        %s1775 = ssub.s32 %s29, 2
        // Predicated region
        $region89: #{tpu_custom_call.1} parent=87 // pred_check
          %p1776 = pneg %p236
        $region90: #{tpu_custom_call.1} parent=87 // pred_check_branch
          %1778 = sbr.rel (%p1776) target = $region92
        $region91: #{tpu_custom_call.1} parent=87 // pred_region
          %s1779 = sand.u32 %s221, 1
          %s1780 = scalar_lea.sflag [#allocation4], %s1779
          %s1781 = sand.u32 %s221, 1
          %s1782 = smul.addr %s1781, 16
          %s1783 = scalar_lea.vmem [#allocation14], %s1782
          %1784 = dma.done %s1780, 256
        $region92: #{tpu_custom_call.1} parent=87 // pred_fallthru
          _
        // Predicated region
        $region93: #{tpu_custom_call.1} parent=87 // pred_check
          %p1785 = pneg %p264
        $region94: #{tpu_custom_call.1} parent=87 // pred_check_branch
          %1787 = sbr.rel (%p1785) target = $region96
        $region95: #{tpu_custom_call.1} parent=87 // pred_region
          %s1788 = sand.u32 %s249, 1
          %s1789 = scalar_lea.sflag [#allocation16], %s1788
          %s1790 = sand.u32 %s249, 1
          %s1791 = smul.addr %s1790, 64
          %s1792 = scalar_lea.vmem [#allocation15], %s1791
          %1793 = dma.done %s1789, 1024
        $region96: #{tpu_custom_call.1} parent=87 // pred_fallthru
          _
      $region88: #{tpu_custom_call.1} parent=5 // pred_fallthru
        _
    $region6: #{tpu_custom_call.1} parent=1 // loop_footer
      %s33 = sadd.s32 1, %s29
    $region7: #{tpu_custom_call.1} parent=1 // loop_footer_branch
      %28 = sbr.rel target = $region3
    $region8: #{tpu_custom_call.1} parent=1 // loop_exit
      _
    %1794 = vsyncpa [#allocation3], 1
    %s1795 = scalar_lea.sflag [#allocation3], 1
    %1796 = vsyncpa %s1795, 1
    %1797 = vsyncpa [#allocation6], 1
    %s1798 = scalar_lea.sflag [#allocation6], 1
    %1799 = vsyncpa %s1798, 1
    %1800 = vsyncpa [#allocation9], 1
    %1801 = vsyncpa [#allocation12], 1
    %1802 = vsyncpa [#allocation4], 1
    %s1803 = scalar_lea.sflag [#allocation4], 1
    %1804 = vsyncpa %s1803, 1
    %1805 = vsyncpa [#allocation16], 1
    %s1806 = scalar_lea.sflag [#allocation16], 1
    %1807 = vsyncpa %s1806, 1

</llo_original>
